<compile_context>
chip_gen: v6e
topology: v6e:2x2x1
jax: 0.10.0
libtpu: 0.0.40
codegen_flags: <defaults>
</compile_context>

<pallas_src>
import functools

import jax
import jax.numpy as jnp
from jax.experimental import pallas as pl
from jax.experimental.pallas import tpu as pltpu

# ----------------------------- configuration --------------------------------
B = 2            # batch
CIN = 4          # input image channels (stand-in for RGB)
H, W = 16, 8     # spatial (HW = 128, lane friendly)
HW = H * W
D = 256          # feature dim (stand-in for 2048)
K = 13           # keypoints
BRANCH = K + 1   # 14 branches (13 local + 1 global)
BN_EPS = 1e-5


# --------------------- fused HOReid forward kernel ---------------------------
def _horeid_kernel(x_ref, w_enc_ref, w_pose_ref, bn_ref, w_gcn_ref, adj_ref,
                   out_ref):
    # weights (cast tiny projections to bf16 in-kernel; big ones arrive bf16)
    w_enc = w_enc_ref[...].astype(jnp.bfloat16)     # (CIN, D)
    w_pose = w_pose_ref[...].astype(jnp.bfloat16)   # (K, CIN)
    w_gcn = w_gcn_ref[...]                          # (D, D) bf16
    adj_blk = adj_ref[...]                          # (B*BRANCH, B*BRANCH) bf16

    # eval-mode BN already folded on host: [scale1, shift1, scale2, shift2]
    scale1 = bn_ref[0]                              # (BRANCH, D)
    shift1 = bn_ref[1]
    scale2 = bn_ref[2]
    shift2 = bn_ref[3]

    mean_row = jnp.full((1, HW), 1.0 / HW, jnp.float32)
    is_global_row = (
        jax.lax.broadcasted_iota(jnp.int32, (BRANCH, 1), 0) == K)  # (BRANCH,1)
    one = jnp.ones((1, 1), jnp.float32)

    feats_list = []
    kp_list = []
    for b in range(B):                               # B=2, static unroll
        x_h = x_ref[b]                               # (HW, CIN) f32, NHWC view
        x_hb = x_h.astype(jnp.bfloat16)

        # 1x1-conv encoder projection on the MXU: (HW,CIN)@(CIN,D)
        fm = jnp.dot(x_hb, w_enc,
                     preferred_element_type=jnp.float32)          # (HW, D)

        # 1x1-conv pose head on the MXU: (K,CIN) x (HW,CIN)^T -> (K,HW)
        heat = jax.lax.dot_general(
            w_pose, x_hb, (((1,), (1,)), ((), ())),
            preferred_element_type=jnp.float32)                   # (K, HW)

        # spatial softmax with temperature 10.0 (ScoremapComputer norm)
        logits = 10.0 * heat
        m = jnp.max(logits, axis=-1, keepdims=True)
        e = jnp.exp(logits - m)
        score = e / jnp.sum(e, axis=-1, keepdims=True)            # (K, HW)

        # skeleton-weighted pooling + global mean row fused into one matmul;
        # global max added separately (single XLU axis-0 reduce).
        score_ext = jnp.concatenate([score, mean_row], axis=0)    # (BRANCH,HW)
        pooled = jnp.dot(score_ext.astype(jnp.bfloat16),
                         fm.astype(jnp.bfloat16),
                         preferred_element_type=jnp.float32)      # (BRANCH, D)
        gmax = jnp.max(fm, axis=0, keepdims=True)                 # (1, D)
        feats = pooled + jnp.where(is_global_row, gmax, 0.0)      # (BRANCH, D)

        # keypoint confidences: max of normalized score, L1-normalized over
        # the 13 local parts, global confidence = 1, sqrt for final scaling.
        conf = jnp.max(score, axis=-1, keepdims=True)             # (K, 1)
        conf = conf / jnp.maximum(
            jnp.sum(conf, axis=0, keepdims=True), 1e-12)
        kp = jnp.concatenate([jnp.sqrt(conf), one], axis=0)       # (BRANCH,1)

        feats_list.append(feats)
        kp_list.append(kp)

    # residual graph conv, batched over B via block-diagonal adjacency
    feats_all = jnp.concatenate(feats_list, axis=0)               # (B*BRANCH,D)
    h = jnp.dot(feats_all.astype(jnp.bfloat16), w_gcn,
                preferred_element_type=jnp.float32)
    h = jnp.dot(adj_blk, h.astype(jnp.bfloat16),
                preferred_element_type=jnp.float32)
    gcned_all = jnp.maximum(h, 0.0) + feats_all                   # (B*BRANCH,D)

    # BNClassifiers (eval BN only; classifier heads dead in eval path)
    for b in range(B):
        feats_b = feats_all[b * BRANCH:(b + 1) * BRANCH, :]
        gcned_b = gcned_all[b * BRANCH:(b + 1) * BRANCH, :]
        kp = kp_list[b]
        bned = feats_b * scale1 + shift1
        bned_g = gcned_b * scale2 + shift2
        out_ref[0, b] = kp * bned       # features_stage1 (pre-reshape)
        out_ref[1, b] = bned            # features_stage2
        out_ref[2, b] = kp * bned_g     # gcned_features_stage1 (pre-reshape)
        out_ref[3, b] = bned_g          # gcned_features_stage2


_FLOPS = int(B * (2 * HW * CIN * D          # encoder matmul
                  + 2 * K * CIN * HW        # pose head matmul
                  + 2 * BRANCH * HW * D)    # pooling (+ mean row) matmul
             + 2 * (B * BRANCH) * D * D     # batched gcn X @ W
             + 2 * (B * BRANCH) * (B * BRANCH) * D)   # adj_blk @ h
_TRANS = int(B * (K * HW + K + BRANCH))     # exp + sqrt
_BYTES = int(4 * (B * HW * CIN + CIN * D + K * CIN + 4 * BRANCH * D)
             + 2 * (D * D + (B * BRANCH) ** 2)
             + 4 * 4 * B * BRANCH * D)


def _full_spec(shape):
    return pl.BlockSpec(shape, lambda i, _s=shape: (0,) * len(_s))


def horeid_fused(x_hwc, params):
    out_shape = jax.ShapeDtypeStruct((4, B, BRANCH, D), jnp.float32)
    return pl.pallas_call(
        _horeid_kernel,
        out_shape=out_shape,
        grid=(1,),
        in_specs=[
            _full_spec((B, HW, CIN)),
            _full_spec((CIN, D)),
            _full_spec((K, CIN)),
            _full_spec((4, BRANCH, D)),
            _full_spec((D, D)),
            _full_spec((B * BRANCH, B * BRANCH)),
        ],
        out_specs=_full_spec((4, B, BRANCH, D)),
        compiler_params=pltpu.CompilerParams(
            dimension_semantics=("arbitrary",)),
        cost_estimate=pl.CostEstimate(
            flops=_FLOPS, transcendentals=_TRANS, bytes_accessed=_BYTES),
    )(x_hwc, params["w_enc"], params["w_pose"], params["bn_pack"],
      params["w_gcn"], params["adj_blk"])


# ------------------------------ glue / params --------------------------------
LINKED_EDGES = [[13, 0], [13, 1], [13, 2], [13, 3], [13, 4], [13, 5], [13, 6],
                [13, 7], [13, 8], [13, 9], [13, 10], [13, 11], [13, 12],
                [0, 1], [0, 2], [1, 2], [1, 7], [2, 8], [7, 8], [1, 8], [2, 7],
                [1, 3], [3, 5], [2, 4], [4, 6], [7, 9], [9, 11], [8, 10],
                [10, 12]]


def generate_adj(node_num, linked_edges, self_connect=0.0):
    adj = jnp.zeros((node_num, node_num), jnp.float32)
    for i, j in linked_edges:
        adj = adj.at[i, j].set(1.0)
        adj = adj.at[j, i].set(1.0)
    if self_connect > 0:
        adj = adj + self_connect * jnp.eye(node_num, dtype=jnp.float32)
    row_sum = jnp.clip(jnp.sum(adj, axis=1, keepdims=True), 1e-12, None)
    return adj / row_sum                  # row-normalized adjacency


def _fold_bn(gamma, beta, mean, var):
    scale = gamma * jax.lax.rsqrt(var + BN_EPS)
    shift = beta - mean * scale
    return scale, shift


def init_params(key):
    ks = jax.random.split(key, 8)
    p = {}
    p["w_enc"] = jax.random.normal(ks[0], (CIN, D), jnp.float32) * 0.1
    p["w_pose"] = jax.random.normal(ks[1], (K, CIN), jnp.float32) * 0.1

    # BNClassifiers #1 and #2: eval-mode BN statistics folded into
    # (scale, shift) and packed into a single (4, BRANCH, D) operand.
    # Classifier linear heads are only needed for the training path.
    packed = []
    for kk in (ks[2], ks[3]):
        sub = jax.random.split(kk, 2)
        gamma = 1.0 + 0.01 * jax.random.normal(sub[0], (BRANCH, D), jnp.float32)
        beta = jnp.zeros((BRANCH, D), jnp.float32)   # BN bias frozen at 0
        mean = jnp.zeros((BRANCH, D), jnp.float32)
        var = jnp.ones((BRANCH, D), jnp.float32)
        scale, shift = _fold_bn(gamma, beta, mean, var)
        packed.extend([scale, shift])
    p["bn_pack"] = jnp.stack(packed, axis=0)          # (4, BRANCH, D)

    # GCN weight kept bf16 (MXU fast path, half the DMA) and block-diagonal
    # adjacency so the GCN runs batched over B inside the kernel.
    p["w_gcn"] = (jax.random.normal(ks[4], (D, D), jnp.float32)
                  * 0.02).astype(jnp.bfloat16)
    adj = generate_adj(BRANCH, LINKED_EDGES, self_connect=0.0)
    p["adj_blk"] = jnp.kron(jnp.eye(B, dtype=jnp.float32),
                            adj).astype(jnp.bfloat16)
    return p


@functools.partial(jax.jit, static_argnames=("training",))
def horeid_forward(params, images, training=False):
    """images: NCHW float32 (B, CIN, H, W).  Eval path of HOReid.forward."""
    if training:
        # TODO(synk): training branch requires mining_hard_pairs / GMNet /
        # Verificator which are not defined in the provided source.
        raise NotImplementedError("training path not implemented")

    # single NHWC flat view for the kernel (one tiny transpose+reshape)
    x_hwc = jnp.transpose(images, (0, 2, 3, 1)).reshape(B, HW, CIN)

    out = horeid_fused(x_hwc, params)                 # (4, B, BRANCH, D)

    # torch.cat(list, dim=1) over branches == row-major reshape of (B,14,D)
    features_stage1 = out[0].reshape(B, BRANCH * D)
    features_stage2 = out[1]
    gcned_features_stage1 = out[2].reshape(B, BRANCH * D)
    gcned_features_stage2 = out[3]

    return ((features_stage1, features_stage2),
            (gcned_features_stage1, gcned_features_stage2))


# --------------------------------- main --------------------------------------
if __name__ == "__main__":
    key = jax.random.PRNGKey(0)
    k_par, k_img = jax.random.split(key)
    params = init_params(k_par)
    images = jax.random.normal(k_img, (B, CIN, H, W), jnp.float32)

    (f1, f2), (g1, g2) = horeid_forward(params, images, training=False)
    jax.block_until_ready((f1, f2, g1, g2))

    assert f1.shape == (B, BRANCH * D)
    assert f2.shape == (B, BRANCH, D)
    assert g1.shape == (B, BRANCH * D)
    assert g2.shape == (B, BRANCH, D)
    assert jnp.all(jnp.isfinite(f1)) and jnp.all(jnp.isfinite(g1))
    assert jnp.all(jnp.isfinite(f2)) and jnp.all(jnp.isfinite(g2))
    print("KERNEL_OK")
</pallas_src>

<mosaic_0001>
module attributes {stable_mosaic.version = 11 : i64} {
  func.func @_horeid_kernel(%arg0: i32, %arg1: memref<2x128x4xf32, #tpu.memory_space<vmem>>, %arg2: memref<4x256xf32, #tpu.memory_space<vmem>>, %arg3: memref<13x4xf32, #tpu.memory_space<vmem>>, %arg4: memref<4x14x256xf32, #tpu.memory_space<vmem>>, %arg5: memref<256x256xbf16, #tpu.memory_space<vmem>>, %arg6: memref<28x28xbf16, #tpu.memory_space<vmem>>, %arg7: memref<4x2x14x256xf32, #tpu.memory_space<vmem>>) attributes {dimension_semantics = [#tpu.dimension_semantics<arbitrary>], iteration_bounds = array<i64: 1>, scalar_prefetch = 0 : i64, scratch_operands = 0 : i64, tpu.core_type = #tpu.core_type<tc>, window_params = [{pipeline_mode = #tpu.pipeline_mode<synchronous>, transform_indices = @transform_0, window_bounds = array<i64: 2, 128, 4>}, {pipeline_mode = #tpu.pipeline_mode<synchronous>, transform_indices = @transform_1, window_bounds = array<i64: 4, 256>}, {pipeline_mode = #tpu.pipeline_mode<synchronous>, transform_indices = @transform_2, window_bounds = array<i64: 13, 4>}, {pipeline_mode = #tpu.pipeline_mode<synchronous>, transform_indices = @transform_3, window_bounds = array<i64: 4, 14, 256>}, {pipeline_mode = #tpu.pipeline_mode<synchronous>, transform_indices = @transform_4, window_bounds = array<i64: 256, 256>}, {pipeline_mode = #tpu.pipeline_mode<synchronous>, transform_indices = @transform_5, window_bounds = array<i64: 28, 28>}, {pipeline_mode = #tpu.pipeline_mode<synchronous>, transform_indices = @transform_6, window_bounds = array<i64: 4, 2, 14, 256>}]} {
    %c0 = arith.constant 0 : index
    %c0_0 = arith.constant 0 : index
    %0 = vector.load %arg2[%c0, %c0_0] : memref<4x256xf32, #tpu.memory_space<vmem>>, vector<4x256xf32>
    %1 = arith.truncf %0 : vector<4x256xf32> to vector<4x256xbf16>
    %c0_1 = arith.constant 0 : index
    %c0_2 = arith.constant 0 : index
    %2 = vector.load %arg3[%c0_1, %c0_2] : memref<13x4xf32, #tpu.memory_space<vmem>>, vector<13x4xf32>
    %3 = arith.truncf %2 : vector<13x4xf32> to vector<13x4xbf16>
    %c0_3 = arith.constant 0 : index
    %c0_4 = arith.constant 0 : index
    %4 = vector.load %arg5[%c0_3, %c0_4] : memref<256x256xbf16, #tpu.memory_space<vmem>>, vector<256x256xbf16>
    %c0_5 = arith.constant 0 : index
    %c0_6 = arith.constant 0 : index
    %5 = vector.load %arg6[%c0_5, %c0_6] : memref<28x28xbf16, #tpu.memory_space<vmem>>, vector<28x28xbf16>
    %c0_7 = arith.constant 0 : index
    %c0_8 = arith.constant 0 : index
    %c0_9 = arith.constant 0 : index
    %6 = vector.load %arg4[%c0_7, %c0_8, %c0_9] : memref<4x14x256xf32, #tpu.memory_space<vmem>>, vector<1x14x256xf32>
    %7 = vector.shape_cast %6 : vector<1x14x256xf32> to vector<14x256xf32>
    %c1 = arith.constant 1 : index
    %c0_10 = arith.constant 0 : index
    %c0_11 = arith.constant 0 : index
    %8 = vector.load %arg4[%c1, %c0_10, %c0_11] : memref<4x14x256xf32, #tpu.memory_space<vmem>>, vector<1x14x256xf32>
    %9 = vector.shape_cast %8 : vector<1x14x256xf32> to vector<14x256xf32>
    %c2 = arith.constant 2 : index
    %c0_12 = arith.constant 0 : index
    %c0_13 = arith.constant 0 : index
    %10 = vector.load %arg4[%c2, %c0_12, %c0_13] : memref<4x14x256xf32, #tpu.memory_space<vmem>>, vector<1x14x256xf32>
    %11 = vector.shape_cast %10 : vector<1x14x256xf32> to vector<14x256xf32>
    %c3 = arith.constant 3 : index
    %c0_14 = arith.constant 0 : index
    %c0_15 = arith.constant 0 : index
    %12 = vector.load %arg4[%c3, %c0_14, %c0_15] : memref<4x14x256xf32, #tpu.memory_space<vmem>>, vector<1x14x256xf32>
    %13 = vector.shape_cast %12 : vector<1x14x256xf32> to vector<14x256xf32>
    %cst = arith.constant 7.812500e-03 : f32
    %14 = vector.broadcast %cst : f32 to vector<1x128xf32>
    %15 = tpu.iota {dimensions = array<i32: 0>} : vector<14x1xi32>
    %c13_i32 = arith.constant 13 : i32
    %16 = vector.broadcast %c13_i32 : i32 to vector<14x1xi32>
    %17 = arith.cmpi eq, %15, %16 : vector<14x1xi32>
    %cst_16 = arith.constant 1.000000e+00 : f32
    %18 = vector.broadcast %cst_16 : f32 to vector<1x1xf32>
    %c0_17 = arith.constant 0 : index
    %c0_18 = arith.constant 0 : index
    %c0_19 = arith.constant 0 : index
    %19 = vector.load %arg1[%c0_17, %c0_18, %c0_19] : memref<2x128x4xf32, #tpu.memory_space<vmem>>, vector<1x128x4xf32>
    %20 = vector.shape_cast %19 : vector<1x128x4xf32> to vector<128x4xf32>
    %21 = arith.truncf %20 : vector<128x4xf32> to vector<128x4xbf16>
    %cst_20 = arith.constant dense<0.000000e+00> : vector<128x256xf32>
    %22 = tpu.matmul %21, %1, %cst_20 {dimension_numbers = #tpu.dot_dimension_numbers<[1], [0], [0], [1], [0, 0, 1, 1], [], []>} : vector<128x4xbf16>, vector<4x256xbf16>, vector<128x256xf32> -> vector<128x256xf32>
    %cst_21 = arith.constant dense<0.000000e+00> : vector<13x128xf32>
    %23 = tpu.matmul %3, %21, %cst_21 {dimension_numbers = #tpu.dot_dimension_numbers<[1], [1], [0], [0], [0, 0, 1, 0], [], []>} : vector<13x4xbf16>, vector<128x4xbf16>, vector<13x128xf32> -> vector<13x128xf32>
    %cst_22 = arith.constant 1.000000e+01 : f32
    %24 = vector.broadcast %cst_22 : f32 to vector<13x128xf32>
    %25 = arith.mulf %24, %23 : vector<13x128xf32>
    %cst_23 = arith.constant dense<0xFF800000> : vector<13xf32>
    %26 = vector.multi_reduction <maximumf>, %25, %cst_23 [1] : vector<13x128xf32> to vector<13xf32>
    %27 = vector.shape_cast %26 : vector<13xf32> to vector<13x1xf32>
    %28 = vector.broadcast %27 : vector<13x1xf32> to vector<13x128xf32>
    %29 = arith.subf %25, %28 : vector<13x128xf32>
    %30 = math.exp %29 : vector<13x128xf32>
    %cst_24 = arith.constant dense<0.000000e+00> : vector<13xf32>
    %31 = vector.multi_reduction <add>, %30, %cst_24 [1] : vector<13x128xf32> to vector<13xf32>
    %32 = vector.shape_cast %31 : vector<13xf32> to vector<13x1xf32>
    %33 = vector.broadcast %32 : vector<13x1xf32> to vector<13x128xf32>
    %34 = arith.divf %30, %33 : vector<13x128xf32>
    %35 = tpu.concatenate %34, %14 in 0 : vector<13x128xf32>, vector<1x128xf32> -> vector<14x128xf32>
    %36 = arith.truncf %35 : vector<14x128xf32> to vector<14x128xbf16>
    %37 = arith.truncf %22 : vector<128x256xf32> to vector<128x256xbf16>
    %cst_25 = arith.constant dense<0.000000e+00> : vector<14x256xf32>
    %38 = tpu.matmul %36, %37, %cst_25 {dimension_numbers = #tpu.dot_dimension_numbers<[1], [0], [0], [1], [0, 0, 1, 1], [], []>} : vector<14x128xbf16>, vector<128x256xbf16>, vector<14x256xf32> -> vector<14x256xf32>
    %cst_26 = arith.constant dense<0xFF800000> : vector<256xf32>
    %39 = vector.multi_reduction <maximumf>, %22, %cst_26 [0] : vector<128x256xf32> to vector<256xf32>
    %40 = vector.shape_cast %39 : vector<256xf32> to vector<1x256xf32>
    %cst_27 = arith.constant 0.000000e+00 : f32
    %41 = vector.shape_cast %17 : vector<14x1xi1> to vector<14x1xi1>
    %42 = vector.broadcast %41 : vector<14x1xi1> to vector<14x256xi1>
    %43 = vector.shape_cast %40 : vector<1x256xf32> to vector<1x256xf32>
    %44 = vector.broadcast %43 : vector<1x256xf32> to vector<14x256xf32>
    %45 = vector.broadcast %cst_27 : f32 to vector<14x256xf32>
    %46 = arith.select %42, %44, %45 : vector<14x256xi1>, vector<14x256xf32>
    %47 = arith.addf %38, %46 : vector<14x256xf32>
    %cst_28 = arith.constant dense<0xFF800000> : vector<13xf32>
    %48 = vector.multi_reduction <maximumf>, %34, %cst_28 [1] : vector<13x128xf32> to vector<13xf32>
    %49 = vector.shape_cast %48 : vector<13xf32> to vector<13x1xf32>
    %cst_29 = arith.constant dense<0.000000e+00> : vector<1xf32>
    %50 = vector.multi_reduction <add>, %49, %cst_29 [0] : vector<13x1xf32> to vector<1xf32>
    %51 = vector.shape_cast %50 : vector<1xf32> to vector<1x1xf32>
    %cst_30 = arith.constant 9.99999996E-13 : f32
    %52 = vector.broadcast %cst_30 : f32 to vector<1x1xf32>
    %53 = arith.maximumf %51, %52 : vector<1x1xf32>
    %54 = vector.broadcast %53 : vector<1x1xf32> to vector<13x1xf32>
    %55 = arith.divf %49, %54 : vector<13x1xf32>
    %56 = math.sqrt %55 : vector<13x1xf32>
    %57 = tpu.concatenate %56, %18 in 0 : vector<13x1xf32>, vector<1x1xf32> -> vector<14x1xf32>
    %c1_31 = arith.constant 1 : index
    %c0_32 = arith.constant 0 : index
    %c0_33 = arith.constant 0 : index
    %58 = vector.load %arg1[%c1_31, %c0_32, %c0_33] : memref<2x128x4xf32, #tpu.memory_space<vmem>>, vector<1x128x4xf32>
    %59 = vector.shape_cast %58 : vector<1x128x4xf32> to vector<128x4xf32>
    %60 = arith.truncf %59 : vector<128x4xf32> to vector<128x4xbf16>
    %cst_34 = arith.constant dense<0.000000e+00> : vector<128x256xf32>
    %61 = tpu.matmul %60, %1, %cst_34 {dimension_numbers = #tpu.dot_dimension_numbers<[1], [0], [0], [1], [0, 0, 1, 1], [], []>} : vector<128x4xbf16>, vector<4x256xbf16>, vector<128x256xf32> -> vector<128x256xf32>
    %cst_35 = arith.constant dense<0.000000e+00> : vector<13x128xf32>
    %62 = tpu.matmul %3, %60, %cst_35 {dimension_numbers = #tpu.dot_dimension_numbers<[1], [1], [0], [0], [0, 0, 1, 0], [], []>} : vector<13x4xbf16>, vector<128x4xbf16>, vector<13x128xf32> -> vector<13x128xf32>
    %cst_36 = arith.constant 1.000000e+01 : f32
    %63 = vector.broadcast %cst_36 : f32 to vector<13x128xf32>
    %64 = arith.mulf %63, %62 : vector<13x128xf32>
    %cst_37 = arith.constant dense<0xFF800000> : vector<13xf32>
    %65 = vector.multi_reduction <maximumf>, %64, %cst_37 [1] : vector<13x128xf32> to vector<13xf32>
    %66 = vector.shape_cast %65 : vector<13xf32> to vector<13x1xf32>
    %67 = vector.broadcast %66 : vector<13x1xf32> to vector<13x128xf32>
    %68 = arith.subf %64, %67 : vector<13x128xf32>
    %69 = math.exp %68 : vector<13x128xf32>
    %cst_38 = arith.constant dense<0.000000e+00> : vector<13xf32>
    %70 = vector.multi_reduction <add>, %69, %cst_38 [1] : vector<13x128xf32> to vector<13xf32>
    %71 = vector.shape_cast %70 : vector<13xf32> to vector<13x1xf32>
    %72 = vector.broadcast %71 : vector<13x1xf32> to vector<13x128xf32>
    %73 = arith.divf %69, %72 : vector<13x128xf32>
    %74 = tpu.concatenate %73, %14 in 0 : vector<13x128xf32>, vector<1x128xf32> -> vector<14x128xf32>
    %75 = arith.truncf %74 : vector<14x128xf32> to vector<14x128xbf16>
    %76 = arith.truncf %61 : vector<128x256xf32> to vector<128x256xbf16>
    %cst_39 = arith.constant dense<0.000000e+00> : vector<14x256xf32>
    %77 = tpu.matmul %75, %76, %cst_39 {dimension_numbers = #tpu.dot_dimension_numbers<[1], [0], [0], [1], [0, 0, 1, 1], [], []>} : vector<14x128xbf16>, vector<128x256xbf16>, vector<14x256xf32> -> vector<14x256xf32>
    %cst_40 = arith.constant dense<0xFF800000> : vector<256xf32>
    %78 = vector.multi_reduction <maximumf>, %61, %cst_40 [0] : vector<128x256xf32> to vector<256xf32>
    %79 = vector.shape_cast %78 : vector<256xf32> to vector<1x256xf32>
    %cst_41 = arith.constant 0.000000e+00 : f32
    %80 = vector.shape_cast %17 : vector<14x1xi1> to vector<14x1xi1>
    %81 = vector.broadcast %80 : vector<14x1xi1> to vector<14x256xi1>
    %82 = vector.shape_cast %79 : vector<1x256xf32> to vector<1x256xf32>
    %83 = vector.broadcast %82 : vector<1x256xf32> to vector<14x256xf32>
    %84 = vector.broadcast %cst_41 : f32 to vector<14x256xf32>
    %85 = arith.select %81, %83, %84 : vector<14x256xi1>, vector<14x256xf32>
    %86 = arith.addf %77, %85 : vector<14x256xf32>
    %cst_42 = arith.constant dense<0xFF800000> : vector<13xf32>
    %87 = vector.multi_reduction <maximumf>, %73, %cst_42 [1] : vector<13x128xf32> to vector<13xf32>
    %88 = vector.shape_cast %87 : vector<13xf32> to vector<13x1xf32>
    %cst_43 = arith.constant dense<0.000000e+00> : vector<1xf32>
    %89 = vector.multi_reduction <add>, %88, %cst_43 [0] : vector<13x1xf32> to vector<1xf32>
    %90 = vector.shape_cast %89 : vector<1xf32> to vector<1x1xf32>
    %cst_44 = arith.constant 9.99999996E-13 : f32
    %91 = vector.broadcast %cst_44 : f32 to vector<1x1xf32>
    %92 = arith.maximumf %90, %91 : vector<1x1xf32>
    %93 = vector.broadcast %92 : vector<1x1xf32> to vector<13x1xf32>
    %94 = arith.divf %88, %93 : vector<13x1xf32>
    %95 = math.sqrt %94 : vector<13x1xf32>
    %96 = tpu.concatenate %95, %18 in 0 : vector<13x1xf32>, vector<1x1xf32> -> vector<14x1xf32>
    %97 = tpu.concatenate %47, %86 in 0 : vector<14x256xf32>, vector<14x256xf32> -> vector<28x256xf32>
    %98 = arith.truncf %97 : vector<28x256xf32> to vector<28x256xbf16>
    %cst_45 = arith.constant dense<0.000000e+00> : vector<28x256xf32>
    %99 = tpu.matmul %98, %4, %cst_45 {dimension_numbers = #tpu.dot_dimension_numbers<[1], [0], [0], [1], [0, 0, 1, 1], [], []>} : vector<28x256xbf16>, vector<256x256xbf16>, vector<28x256xf32> -> vector<28x256xf32>
    %100 = arith.truncf %99 : vector<28x256xf32> to vector<28x256xbf16>
    %cst_46 = arith.constant dense<0.000000e+00> : vector<28x256xf32>
    %101 = tpu.matmul %5, %100, %cst_46 {dimension_numbers = #tpu.dot_dimension_numbers<[1], [0], [0], [1], [0, 0, 1, 1], [], []>} : vector<28x28xbf16>, vector<28x256xbf16>, vector<28x256xf32> -> vector<28x256xf32>
    %cst_47 = arith.constant 0.000000e+00 : f32
    %102 = vector.broadcast %cst_47 : f32 to vector<28x256xf32>
    %103 = arith.maximumf %101, %102 : vector<28x256xf32>
    %104 = arith.addf %103, %97 : vector<28x256xf32>
    %105 = vector.extract_strided_slice %97 {offsets = [0, 0], sizes = [14, 256], strides = [1, 1]} : vector<28x256xf32> to vector<14x256xf32>
    %106 = vector.extract_strided_slice %104 {offsets = [0, 0], sizes = [14, 256], strides = [1, 1]} : vector<28x256xf32> to vector<14x256xf32>
    %107 = arith.mulf %105, %7 : vector<14x256xf32>
    %108 = arith.addf %107, %9 : vector<14x256xf32>
    %109 = arith.mulf %106, %11 : vector<14x256xf32>
    %110 = arith.addf %109, %13 : vector<14x256xf32>
    %111 = vector.broadcast %57 : vector<14x1xf32> to vector<14x256xf32>
    %112 = arith.mulf %111, %108 : vector<14x256xf32>
    %c0_48 = arith.constant 0 : index
    %c0_49 = arith.constant 0 : index
    %c0_50 = arith.constant 0 : index
    %c0_51 = arith.constant 0 : index
    %113 = vector.load %arg7[%c0_48, %c0_49, %c0_50, %c0_51] : memref<4x2x14x256xf32, #tpu.memory_space<vmem>>, vector<1x1x14x256xf32>
    %114 = vector.shape_cast %113 : vector<1x1x14x256xf32> to vector<14x256xf32>
    %115 = vector.shape_cast %112 : vector<14x256xf32> to vector<1x1x14x256xf32>
    tpu.vector_store %arg7[%c0_48, %c0_49, %c0_50, %c0_51], %115 {strides = array<i32>} : memref<4x2x14x256xf32, #tpu.memory_space<vmem>>, vector<1x1x14x256xf32>,
    %c1_52 = arith.constant 1 : index
    %c0_53 = arith.constant 0 : index
    %c0_54 = arith.constant 0 : index
    %c0_55 = arith.constant 0 : index
    %116 = vector.load %arg7[%c1_52, %c0_53, %c0_54, %c0_55] : memref<4x2x14x256xf32, #tpu.memory_space<vmem>>, vector<1x1x14x256xf32>
    %117 = vector.shape_cast %116 : vector<1x1x14x256xf32> to vector<14x256xf32>
    %118 = vector.shape_cast %108 : vector<14x256xf32> to vector<1x1x14x256xf32>
    tpu.vector_store %arg7[%c1_52, %c0_53, %c0_54, %c0_55], %118 {strides = array<i32>} : memref<4x2x14x256xf32, #tpu.memory_space<vmem>>, vector<1x1x14x256xf32>,
    %119 = vector.broadcast %57 : vector<14x1xf32> to vector<14x256xf32>
    %120 = arith.mulf %119, %110 : vector<14x256xf32>
    %c2_56 = arith.constant 2 : index
    %c0_57 = arith.constant 0 : index
    %c0_58 = arith.constant 0 : index
    %c0_59 = arith.constant 0 : index
    %121 = vector.load %arg7[%c2_56, %c0_57, %c0_58, %c0_59] : memref<4x2x14x256xf32, #tpu.memory_space<vmem>>, vector<1x1x14x256xf32>
    %122 = vector.shape_cast %121 : vector<1x1x14x256xf32> to vector<14x256xf32>
    %123 = vector.shape_cast %120 : vector<14x256xf32> to vector<1x1x14x256xf32>
    tpu.vector_store %arg7[%c2_56, %c0_57, %c0_58, %c0_59], %123 {strides = array<i32>} : memref<4x2x14x256xf32, #tpu.memory_space<vmem>>, vector<1x1x14x256xf32>,
    %c3_60 = arith.constant 3 : index
    %c0_61 = arith.constant 0 : index
    %c0_62 = arith.constant 0 : index
    %c0_63 = arith.constant 0 : index
    %124 = vector.load %arg7[%c3_60, %c0_61, %c0_62, %c0_63] : memref<4x2x14x256xf32, #tpu.memory_space<vmem>>, vector<1x1x14x256xf32>
    %125 = vector.shape_cast %124 : vector<1x1x14x256xf32> to vector<14x256xf32>
    %126 = vector.shape_cast %110 : vector<14x256xf32> to vector<1x1x14x256xf32>
    tpu.vector_store %arg7[%c3_60, %c0_61, %c0_62, %c0_63], %126 {strides = array<i32>} : memref<4x2x14x256xf32, #tpu.memory_space<vmem>>, vector<1x1x14x256xf32>,
    %127 = vector.extract_strided_slice %97 {offsets = [14, 0], sizes = [14, 256], strides = [1, 1]} : vector<28x256xf32> to vector<14x256xf32>
    %128 = vector.extract_strided_slice %104 {offsets = [14, 0], sizes = [14, 256], strides = [1, 1]} : vector<28x256xf32> to vector<14x256xf32>
    %129 = arith.mulf %127, %7 : vector<14x256xf32>
    %130 = arith.addf %129, %9 : vector<14x256xf32>
    %131 = arith.mulf %128, %11 : vector<14x256xf32>
    %132 = arith.addf %131, %13 : vector<14x256xf32>
    %133 = vector.broadcast %96 : vector<14x1xf32> to vector<14x256xf32>
    %134 = arith.mulf %133, %130 : vector<14x256xf32>
    %c0_64 = arith.constant 0 : index
    %c1_65 = arith.constant 1 : index
    %c0_66 = arith.constant 0 : index
    %c0_67 = arith.constant 0 : index
    %135 = vector.load %arg7[%c0_64, %c1_65, %c0_66, %c0_67] : memref<4x2x14x256xf32, #tpu.memory_space<vmem>>, vector<1x1x14x256xf32>
    %136 = vector.shape_cast %135 : vector<1x1x14x256xf32> to vector<14x256xf32>
    %137 = vector.shape_cast %134 : vector<14x256xf32> to vector<1x1x14x256xf32>
    tpu.vector_store %arg7[%c0_64, %c1_65, %c0_66, %c0_67], %137 {strides = array<i32>} : memref<4x2x14x256xf32, #tpu.memory_space<vmem>>, vector<1x1x14x256xf32>,
    %c1_68 = arith.constant 1 : index
    %c1_69 = arith.constant 1 : index
    %c0_70 = arith.constant 0 : index
    %c0_71 = arith.constant 0 : index
    %138 = vector.load %arg7[%c1_68, %c1_69, %c0_70, %c0_71] : memref<4x2x14x256xf32, #tpu.memory_space<vmem>>, vector<1x1x14x256xf32>
    %139 = vector.shape_cast %138 : vector<1x1x14x256xf32> to vector<14x256xf32>
    %140 = vector.shape_cast %130 : vector<14x256xf32> to vector<1x1x14x256xf32>
    tpu.vector_store %arg7[%c1_68, %c1_69, %c0_70, %c0_71], %140 {strides = array<i32>} : memref<4x2x14x256xf32, #tpu.memory_space<vmem>>, vector<1x1x14x256xf32>,
    %141 = vector.broadcast %96 : vector<14x1xf32> to vector<14x256xf32>
    %142 = arith.mulf %141, %132 : vector<14x256xf32>
    %c2_72 = arith.constant 2 : index
    %c1_73 = arith.constant 1 : index
    %c0_74 = arith.constant 0 : index
    %c0_75 = arith.constant 0 : index
    %143 = vector.load %arg7[%c2_72, %c1_73, %c0_74, %c0_75] : memref<4x2x14x256xf32, #tpu.memory_space<vmem>>, vector<1x1x14x256xf32>
    %144 = vector.shape_cast %143 : vector<1x1x14x256xf32> to vector<14x256xf32>
    %145 = vector.shape_cast %142 : vector<14x256xf32> to vector<1x1x14x256xf32>
    tpu.vector_store %arg7[%c2_72, %c1_73, %c0_74, %c0_75], %145 {strides = array<i32>} : memref<4x2x14x256xf32, #tpu.memory_space<vmem>>, vector<1x1x14x256xf32>,
    %c3_76 = arith.constant 3 : index
    %c1_77 = arith.constant 1 : index
    %c0_78 = arith.constant 0 : index
    %c0_79 = arith.constant 0 : index
    %146 = vector.load %arg7[%c3_76, %c1_77, %c0_78, %c0_79] : memref<4x2x14x256xf32, #tpu.memory_space<vmem>>, vector<1x1x14x256xf32>
    %147 = vector.shape_cast %146 : vector<1x1x14x256xf32> to vector<14x256xf32>
    %148 = vector.shape_cast %132 : vector<14x256xf32> to vector<1x1x14x256xf32>
    tpu.vector_store %arg7[%c3_76, %c1_77, %c0_78, %c0_79], %148 {strides = array<i32>} : memref<4x2x14x256xf32, #tpu.memory_space<vmem>>, vector<1x1x14x256xf32>,
    return
  }
  func.func @transform_0(%arg0: i32) -> (i32, i32, i32) {
    %c0_i32 = arith.constant 0 : i32
    %c0_i32_0 = arith.constant 0 : i32
    %c0_i32_1 = arith.constant 0 : i32
    %c0_i32_2 = arith.constant 0 : i32
    return %c0_i32, %c0_i32_0, %c0_i32_1 : i32, i32, i32
  }
  func.func @transform_1(%arg0: i32) -> (i32, i32) {
    %c0_i32 = arith.constant 0 : i32
    %c0_i32_0 = arith.constant 0 : i32
    %c0_i32_1 = arith.constant 0 : i32
    return %c0_i32, %c0_i32_0 : i32, i32
  }
  func.func @transform_2(%arg0: i32) -> (i32, i32) {
    %c0_i32 = arith.constant 0 : i32
    %c0_i32_0 = arith.constant 0 : i32
    %c0_i32_1 = arith.constant 0 : i32
    return %c0_i32, %c0_i32_0 : i32, i32
  }
  func.func @transform_3(%arg0: i32) -> (i32, i32, i32) {
    %c0_i32 = arith.constant 0 : i32
    %c0_i32_0 = arith.constant 0 : i32
    %c0_i32_1 = arith.constant 0 : i32
    %c0_i32_2 = arith.constant 0 : i32
    return %c0_i32, %c0_i32_0, %c0_i32_1 : i32, i32, i32
  }
  func.func @transform_4(%arg0: i32) -> (i32, i32) {
    %c0_i32 = arith.constant 0 : i32
    %c0_i32_0 = arith.constant 0 : i32
    %c0_i32_1 = arith.constant 0 : i32
    return %c0_i32, %c0_i32_0 : i32, i32
  }
  func.func @transform_5(%arg0: i32) -> (i32, i32) {
    %c0_i32 = arith.constant 0 : i32
    %c0_i32_0 = arith.constant 0 : i32
    %c0_i32_1 = arith.constant 0 : i32
    return %c0_i32, %c0_i32_0 : i32, i32
  }
  func.func @transform_6(%arg0: i32) -> (i32, i32, i32, i32) {
    %c0_i32 = arith.constant 0 : i32
    %c0_i32_0 = arith.constant 0 : i32
    %c0_i32_1 = arith.constant 0 : i32
    %c0_i32_2 = arith.constant 0 : i32
    %c0_i32_3 = arith.constant 0 : i32
    return %c0_i32, %c0_i32_0, %c0_i32_1, %c0_i32_2 : i32, i32, i32, i32
  }
}

</mosaic_0001>

<llo_original>
// kernel: horeid_forward.1
$region0: #{horeid_forward.1}
  #allocation0 [shape = 'u32[]', space=smem, size = 0x4, offset = 0x4, fixed_abs, tag = 'smem constant byte address 0x4 - core index']
  #allocation1 [shape = 'u32[144,128]{1,0:T(1,128)}', space=vmem, size = 0x12000, scoped, tag = 'internal scratch']
  %s0 = inlined_call_operand.vmem [shape: f32[2,128,4], index: 0, kind: input, shape index: {}]
  %s1 = inlined_call_operand.vmem [shape: f32[4,256], index: 1, kind: input, shape index: {}]
  %s2 = inlined_call_operand.vmem [shape: f32[13,4], index: 2, kind: input, shape index: {}]
  %s3 = inlined_call_operand.vmem [shape: f32[4,14,256], index: 3, kind: input, shape index: {}]
  %s4 = inlined_call_operand.vmem [shape: bf16[256,256], index: 4, kind: input, shape index: {}]
  %s5 = inlined_call_operand.vmem [shape: bf16[28,28], index: 5, kind: input, shape index: {}]
  %s6 = inlined_call_operand.vmem [shape: f32[4,2,14,256], index: 6, kind: output, shape index: {}]
  %s7 = sld [smem:[#allocation0]]
  $region34: #{horeid_forward.1} parent=0
    _
  %s9 = ssub.s32 1, %s7
  %s10 = scalar_select 0, %s9, %s7
  // Predicated region
  $region2: #{horeid_forward.1} parent=0 // pred_check
    _
  $region3: #{horeid_forward.1} parent=0 // pred_check_branch
    %12 = sbr.rel (0) target = $region5
  $region4: #{horeid_forward.1} parent=0 // pred_region
    _
  $region5: #{horeid_forward.1} parent=0 // pred_fallthru
    _
  // Predicated region
  $region6: #{horeid_forward.1} parent=0 // pred_check
    _
  $region7: #{horeid_forward.1} parent=0 // pred_check_branch
    %14 = sbr.rel (0) target = $region9
  $region8: #{horeid_forward.1} parent=0 // pred_region
    _
  $region9: #{horeid_forward.1} parent=0 // pred_fallthru
    _
  // Predicated region
  $region10: #{horeid_forward.1} parent=0 // pred_check
    _
  $region11: #{horeid_forward.1} parent=0 // pred_check_branch
    %16 = sbr.rel (0) target = $region13
  $region12: #{horeid_forward.1} parent=0 // pred_region
    _
  $region13: #{horeid_forward.1} parent=0 // pred_fallthru
    _
  // Predicated region
  $region14: #{horeid_forward.1} parent=0 // pred_check
    _
  $region15: #{horeid_forward.1} parent=0 // pred_check_branch
    %18 = sbr.rel (0) target = $region17
  $region16: #{horeid_forward.1} parent=0 // pred_region
    _
  $region17: #{horeid_forward.1} parent=0 // pred_fallthru
    _
  // Predicated region
  $region18: #{horeid_forward.1} parent=0 // pred_check
    _
  $region19: #{horeid_forward.1} parent=0 // pred_check_branch
    %20 = sbr.rel (0) target = $region21
  $region20: #{horeid_forward.1} parent=0 // pred_region
    _
  $region21: #{horeid_forward.1} parent=0 // pred_fallthru
    _
  // Predicated region
  $region22: #{horeid_forward.1} parent=0 // pred_check
    _
  $region23: #{horeid_forward.1} parent=0 // pred_check_branch
    %22 = sbr.rel (0) target = $region25
  $region24: #{horeid_forward.1} parent=0 // pred_region
    _
  $region25: #{horeid_forward.1} parent=0 // pred_fallthru
    _
  %v24 = vld [vmem:[%s1] sm:$0xff]
  %v26 = vcombine.high %v24, %v24
  %v28 = vpack.c.bf16 %v24, %v24
  %v29 = vpack.c.bf16 %v26, %v26
  %v30 = vld [vmem:[%s2] sm:$0xff]
  %v31 = vld [vmem:[%s2 + $0x8] sm:$0x1f]
  %v32 = vpack.c.bf16 %v31, %v30
  %v33 = vld [vmem:[%s4] sm:$0xff]
  %v34 = vld [vmem:[%s4 + $0x8] sm:$0xff]
  %v35 = vld [vmem:[%s4 + $0x10] sm:$0xff]
  %v36 = vld [vmem:[%s4 + $0x18] sm:$0xff]
  %v37 = vld [vmem:[%s4 + $0x20] sm:$0xff]
  %v38 = vld [vmem:[%s4 + $0x28] sm:$0xff]
  %v39 = vld [vmem:[%s4 + $0x30] sm:$0xff]
  %v40 = vld [vmem:[%s4 + $0x38] sm:$0xff]
  %v41 = vld [vmem:[%s4 + $0x40] sm:$0xff]
  %v42 = vld [vmem:[%s4 + $0x48] sm:$0xff]
  %v43 = vld [vmem:[%s4 + $0x50] sm:$0xff]
  %v44 = vld [vmem:[%s4 + $0x58] sm:$0xff]
  %v45 = vld [vmem:[%s4 + $0x60] sm:$0xff]
  %v46 = vld [vmem:[%s4 + $0x68] sm:$0xff]
  %v47 = vld [vmem:[%s4 + $0x70] sm:$0xff]
  %v48 = vld [vmem:[%s4 + $0x78] sm:$0xff]
  %v49 = vld [vmem:[%s4 + $0x80] sm:$0xff]
  %v50 = vld [vmem:[%s4 + $0x88] sm:$0xff]
  %v51 = vld [vmem:[%s4 + $0x90] sm:$0xff]
  %v52 = vld [vmem:[%s4 + $0x98] sm:$0xff]
  %v53 = vld [vmem:[%s4 + $0xa0] sm:$0xff]
  %v54 = vld [vmem:[%s4 + $0xa8] sm:$0xff]
  %v55 = vld [vmem:[%s4 + $0xb0] sm:$0xff]
  %v56 = vld [vmem:[%s4 + $0xb8] sm:$0xff]
  %v57 = vld [vmem:[%s4 + $0xc0] sm:$0xff]
  %v58 = vld [vmem:[%s4 + $0xc8] sm:$0xff]
  %v59 = vld [vmem:[%s4 + $0xd0] sm:$0xff]
  %v60 = vld [vmem:[%s4 + $0xd8] sm:$0xff]
  %v61 = vld [vmem:[%s4 + $0xe0] sm:$0xff]
  %v62 = vld [vmem:[%s4 + $0xe8] sm:$0xff]
  %v63 = vld [vmem:[%s4 + $0xf0] sm:$0xff]
  %v64 = vld [vmem:[%s4 + $0xf8] sm:$0xff]
  %v65 = vld [vmem:[%s5] sm:$0xf]
  %v66 = vld [vmem:[%s5 + $0x4] sm:$0xf]
  %v67 = vld [vmem:[%s5 + $0x8] sm:$0xf]
  %v68 = vld [vmem:[%s5 + $0xc] sm:$0x3]
  %v69 = vld [vmem:[%s3] sm:$0xff]
  %v70 = vld [vmem:[%s3 + $0x8] sm:$0xff]
  %v71 = vld [vmem:[%s3 + $0x10] sm:$0x3f]
  %v72 = vld [vmem:[%s3 + $0x18] sm:$0x3f]
  %s73 = scalar_lea.vmem %s3, 32
  %v74 = vld [vmem:[%s73] sm:$0xff]
  %v75 = vld [vmem:[%s73 + $0x8] sm:$0xff]
  %v76 = vld [vmem:[%s73 + $0x10] sm:$0x3f]
  %v77 = vld [vmem:[%s73 + $0x18] sm:$0x3f]
  %s78 = scalar_lea.vmem %s3, 64
  %v79 = vld [vmem:[%s78] sm:$0xff]
  %v80 = vld [vmem:[%s78 + $0x8] sm:$0xff]
  %v81 = vld [vmem:[%s78 + $0x10] sm:$0x3f]
  %v82 = vld [vmem:[%s78 + $0x18] sm:$0x3f]
  %s83 = scalar_lea.vmem %s3, 96
  %v84 = vld [vmem:[%s83] sm:$0xff]
  %v85 = vld [vmem:[%s83 + $0x8] sm:$0xff]
  %v86 = vld [vmem:[%s83 + $0x10] sm:$0x3f]
  %v87 = vld [vmem:[%s83 + $0x18] sm:$0x3f]
  %v88 = vlaneseq
  %v89 = vshrl.u32 %v88, 7
  %v90 = vadd.s32 %v89, 8
  %vm91 = vcmp.eq.s32.totalorder %v89, 13
  %vm92 = vcmp.eq.s32.totalorder %v90, 13
  %v93 = vld [vmem:[%s0] sm:$0xff]
  %v94 = vld [vmem:[%s0 + $0x8] sm:$0xff]
  %v95 = vld [vmem:[%s0 + $0x10] sm:$0xff]
  %v96 = vld [vmem:[%s0 + $0x18] sm:$0xff]
  %v97 = vld [vmem:[%s0 + $0x20] sm:$0xff]
  %v98 = vld [vmem:[%s0 + $0x28] sm:$0xff]
  %v99 = vld [vmem:[%s0 + $0x30] sm:$0xff]
  %v100 = vld [vmem:[%s0 + $0x38] sm:$0xff]
  %v101 = vld [vmem:[%s0 + $0x40] sm:$0xff]
  %v102 = vld [vmem:[%s0 + $0x48] sm:$0xff]
  %v103 = vld [vmem:[%s0 + $0x50] sm:$0xff]
  %v104 = vld [vmem:[%s0 + $0x58] sm:$0xff]
  %v105 = vld [vmem:[%s0 + $0x60] sm:$0xff]
  %v106 = vld [vmem:[%s0 + $0x68] sm:$0xff]
  %v107 = vld [vmem:[%s0 + $0x70] sm:$0xff]
  %v108 = vld [vmem:[%s0 + $0x78] sm:$0xff]
  %v109 = vpack.c.bf16 %v94, %v93
  %v110 = vpack.c.bf16 %v96, %v95
  %v111 = vpack.c.bf16 %v98, %v97
  %v112 = vpack.c.bf16 %v100, %v99
  %v113 = vpack.c.bf16 %v102, %v101
  %v114 = vpack.c.bf16 %v104, %v103
  %v115 = vpack.c.bf16 %v106, %v105
  %v116 = vpack.c.bf16 %v108, %v107
  %vm117 = vcmask 31744
  %v119 = vsel %vm117, %v109, 0
  %v122 = vsel %vm117, %v110, 0
  %v125 = vsel %vm117, %v111, 0
  %v128 = vsel %vm117, %v112, 0
  %v131 = vsel %vm117, %v113, 0
  %v134 = vsel %vm117, %v114, 0
  %v137 = vsel %vm117, %v115, 0
  %v140 = vsel %vm117, %v116, 0
  %vm142 = vcmask 1041408
  %v144 = vsel %vm142, %v28, 0
  %v147 = vsel %vm142, %v29, 0
  %149 = vmatprep.subr.bf16.mxu0 0
  %150 = vmatpush1.bf16.msra.mxu0 0
  %151 = vmatprep.subr.bf16.mxu0 0
  %152 = vmatpush1.bf16.msra.mxu0 0
  %153 = vmatprep.subr.bf16.mxu0 0
  %154 = vmatpush1.bf16.msra.mxu0 0
  %155 = vmatprep.subr.bf16.mxu0 0
  %156 = vmatpush1.bf16.msra.mxu0 0
  %157 = vmatprep.subr.bf16.mxu0 0
  %158 = vmatpush1.bf16.msra.mxu0 0
  %159 = vmatprep.subr.bf16.mxu0 0
  %160 = vmatpush1.bf16.msra.mxu0 0
  %161 = vmatprep.subr.bf16.mxu0 0
  %162 = vmatpush1.bf16.msra.mxu0 0
  %163 = vmatprep.subr.bf16.mxu0 %v147
  %164 = vmatpush1.bf16.msra.mxu0 %v144
  %165 = vmatprep.subr.bf16.mxu0 0
  %166 = vmatpush2.bf16.msra.mxu0 0
  %167 = vmatprep.subr.bf16.mxu0 0
  %168 = vmatpush2.bf16.msra.mxu0 0
  %169 = vmatprep.subr.bf16.mxu0 0
  %170 = vmatpush2.bf16.msra.mxu0 0
  %171 = vmatprep.subr.bf16.mxu0 0
  %172 = vmatpush2.bf16.msra.mxu0 0
  %173 = vmatprep.subr.bf16.mxu0 0
  %174 = vmatpush2.bf16.msra.mxu0 0
  %175 = vmatprep.subr.bf16.mxu0 0
  %176 = vmatpush2.bf16.msra.mxu0 0
  %177 = vmatprep.subr.bf16.mxu0 0
  %178 = vmatpush2.bf16.msra.mxu0 0
  %179 = vmatprep.subr.bf16.mxu0 0
  %180 = vmatpush2.bf16.msra.mxu0 0
  %181 = vmatprep.mubr.bf16.mxu0 0
  %182 = vmatmul.mubr.bf16.gmra.mxu0 %v119
  %v183 = vpop.f32.mrf.mxu0
  %v184 = vadd.f32 0.0, %v183
  %v185 = vpop.f32.mrf.mxu0
  %v186 = vadd.f32 0.0, %v185
  %v187 = vpop.f32.mrf.mxu0
  %v188 = vadd.f32 0.0, %v187
  %v189 = vpop.f32.mrf.mxu0
  %v190 = vadd.f32 0.0, %v189
  %191 = vmatprep.mubr.bf16.mxu0 0
  %192 = vmatmul.mubr.bf16.gmra.mxu0 %v122
  %v193 = vpop.f32.mrf.mxu0
  %v194 = vadd.f32 0.0, %v193
  %v195 = vpop.f32.mrf.mxu0
  %v196 = vadd.f32 0.0, %v195
  %v197 = vpop.f32.mrf.mxu0
  %v198 = vadd.f32 0.0, %v197
  %v199 = vpop.f32.mrf.mxu0
  %v200 = vadd.f32 0.0, %v199
  %201 = vmatprep.mubr.bf16.mxu0 0
  %202 = vmatmul.mubr.bf16.gmra.mxu0 %v125
  %v203 = vpop.f32.mrf.mxu0
  %v204 = vadd.f32 0.0, %v203
  %v205 = vpop.f32.mrf.mxu0
  %v206 = vadd.f32 0.0, %v205
  %v207 = vpop.f32.mrf.mxu0
  %v208 = vadd.f32 0.0, %v207
  %v209 = vpop.f32.mrf.mxu0
  %v210 = vadd.f32 0.0, %v209
  %211 = vmatprep.mubr.bf16.mxu0 0
  %212 = vmatmul.mubr.bf16.gmra.mxu0 %v128
  %v213 = vpop.f32.mrf.mxu0
  %v214 = vadd.f32 0.0, %v213
  %v215 = vpop.f32.mrf.mxu0
  %v216 = vadd.f32 0.0, %v215
  %v217 = vpop.f32.mrf.mxu0
  %v218 = vadd.f32 0.0, %v217
  %v219 = vpop.f32.mrf.mxu0
  %v220 = vadd.f32 0.0, %v219
  %221 = vmatprep.mubr.bf16.mxu0 0
  %222 = vmatmul.mubr.bf16.gmra.mxu0 %v131
  %v223 = vpop.f32.mrf.mxu0
  %v224 = vadd.f32 0.0, %v223
  %v225 = vpop.f32.mrf.mxu0
  %v226 = vadd.f32 0.0, %v225
  %v227 = vpop.f32.mrf.mxu0
  %v228 = vadd.f32 0.0, %v227
  %v229 = vpop.f32.mrf.mxu0
  %v230 = vadd.f32 0.0, %v229
  %231 = vmatprep.mubr.bf16.mxu0 0
  %232 = vmatmul.mubr.bf16.gmra.mxu0 %v134
  %v233 = vpop.f32.mrf.mxu0
  %v234 = vadd.f32 0.0, %v233
  %v235 = vpop.f32.mrf.mxu0
  %v236 = vadd.f32 0.0, %v235
  %v237 = vpop.f32.mrf.mxu0
  %v238 = vadd.f32 0.0, %v237
  %v239 = vpop.f32.mrf.mxu0
  %v240 = vadd.f32 0.0, %v239
  %241 = vmatprep.mubr.bf16.mxu0 0
  %242 = vmatmul.mubr.bf16.gmra.mxu0 %v137
  %v243 = vpop.f32.mrf.mxu0
  %v244 = vadd.f32 0.0, %v243
  %v245 = vpop.f32.mrf.mxu0
  %v246 = vadd.f32 0.0, %v245
  %v247 = vpop.f32.mrf.mxu0
  %v248 = vadd.f32 0.0, %v247
  %v249 = vpop.f32.mrf.mxu0
  %v250 = vadd.f32 0.0, %v249
  %251 = vmatprep.mubr.bf16.mxu0 0
  %252 = vmatmul.mubr.bf16.gmra.mxu0 %v140
  %v253 = vpop.f32.mrf.mxu0
  %v254 = vadd.f32 0.0, %v253
  %v255 = vpop.f32.mrf.mxu0
  %v256 = vadd.f32 0.0, %v255
  %v257 = vpop.f32.mrf.mxu0
  %v258 = vadd.f32 0.0, %v257
  %v259 = vpop.f32.mrf.mxu0
  %v260 = vadd.f32 0.0, %v259
  %261 = vdwg.mxu0
  %v263 = vsel %vm117, %v32, 0
  %265 = vmatprep.subr.bf16.mxu0 0
  %266 = vmatpush1.bf16.xpose.msra.mxu0 %v140
  %267 = vmatprep.subr.bf16.mxu0 0
  %268 = vmatpush1.bf16.xpose.msra.mxu0 %v137
  %269 = vmatprep.subr.bf16.mxu0 0
  %270 = vmatpush1.bf16.xpose.msra.mxu0 %v134
  %271 = vmatprep.subr.bf16.mxu0 0
  %272 = vmatpush1.bf16.xpose.msra.mxu0 %v131
  %273 = vmatprep.subr.bf16.mxu0 0
  %274 = vmatpush1.bf16.xpose.msra.mxu0 %v128
  %275 = vmatprep.subr.bf16.mxu0 0
  %276 = vmatpush1.bf16.xpose.msra.mxu0 %v125
  %277 = vmatprep.subr.bf16.mxu0 0
  %278 = vmatpush1.bf16.xpose.msra.mxu0 %v122
  %279 = vmatprep.subr.bf16.mxu0 0
  %280 = vmatpush1.bf16.xpose.msra.mxu0 %v119
  %281 = vmatprep.subr.bf16.mxu0 0
  %282 = vmatpush2.bf16.xpose.msra.mxu0 0
  %283 = vmatprep.subr.bf16.mxu0 0
  %284 = vmatpush2.bf16.xpose.msra.mxu0 0
  %285 = vmatprep.subr.bf16.mxu0 0
  %286 = vmatpush2.bf16.xpose.msra.mxu0 0
  %287 = vmatprep.subr.bf16.mxu0 0
  %288 = vmatpush2.bf16.xpose.msra.mxu0 0
  %289 = vmatprep.subr.bf16.mxu0 0
  %290 = vmatpush2.bf16.xpose.msra.mxu0 0
  %291 = vmatprep.subr.bf16.mxu0 0
  %292 = vmatpush2.bf16.xpose.msra.mxu0 0
  %293 = vmatprep.subr.bf16.mxu0 0
  %294 = vmatpush2.bf16.xpose.msra.mxu0 0
  %295 = vmatprep.subr.bf16.mxu0 0
  %296 = vmatpush2.bf16.xpose.msra.mxu0 0
  %297 = vmatprep.mubr.bf16.mxu0 0
  %298 = vmatmul.mubr.bf16.gmra.mxu0 %v263
  %v299 = vpop.f32.mrf.mxu0
  %v300 = vadd.f32 0.0, %v299
  %v301 = vpop.f32.mrf.mxu0
  %v302 = vpop.f32.mrf.mxu0
  %v303 = vadd.f32 0.0, %v302
  %v304 = vpop.f32.mrf.mxu0
  %305 = vdwg.mxu0
  %v306 = vmul.f32 %v300, 10.0
  %v307 = vmul.f32 %v303, 10.0
  %308 = vmax.xlane.f32.xlu0 %v306
  %v309 = vpop.xlane.xlu0 %308
  %vm310 = vcmask 1044480
  %v311 = vsel %vm310, %v307, -inf
  %312 = vmax.xlane.f32.xlu0 %v311
  %v313 = vpop.xlane.xlu0 %312
  %v314 = vsub.f32 %v306, %v309
  %v315 = vsub.f32 %v307, %v313
  %v316 = vmul.f32 %v314, 1.442695
  %v317 = vpow.pop %v316
  %v318 = vmul.f32 %v315, 1.442695
  %v319 = vpow.pop %v318
  %320 = vadd.xlane.f32.xlu0 %v317
  %v321 = vpop.xlane.xlu0 %320
  %v322 = vsel %vm310, %v319, 0.0
  %323 = vadd.xlane.f32.xlu0 %v322
  %v324 = vpop.xlane.xlu0 %323
  %v325 = vrcp.pop %v321
  %v326 = vmul.f32 %v317, %v325
  %v327 = vrcp.pop %v324
  %v328 = vmul.f32 %v319, %v327
  %v329 = vsel %vm310, %v328, 0.0078125
  %v330 = vpack.c.bf16 %v329, %v326
  %v331 = vpack.c.bf16 %v188, %v184
  %v332 = vpack.c.bf16 %v190, %v186
  %v333 = vpack.c.bf16 %v198, %v194
  %v334 = vpack.c.bf16 %v200, %v196
  %v335 = vpack.c.bf16 %v208, %v204
  %v336 = vpack.c.bf16 %v210, %v206
  %v337 = vpack.c.bf16 %v218, %v214
  %v338 = vpack.c.bf16 %v220, %v216
  %v339 = vpack.c.bf16 %v228, %v224
  %v340 = vpack.c.bf16 %v230, %v226
  %v341 = vpack.c.bf16 %v238, %v234
  %v342 = vpack.c.bf16 %v240, %v236
  %v343 = vpack.c.bf16 %v248, %v244
  %v344 = vpack.c.bf16 %v250, %v246
  %v345 = vpack.c.bf16 %v258, %v254
  %v346 = vpack.c.bf16 %v260, %v256
  %v347 = vmax.f32 %v184, %v194
  %v348 = vmax.f32 %v188, %v198
  %v349 = vmax.f32 %v347, %v204
  %v350 = vmax.f32 %v348, %v208
  %v351 = vmax.f32 %v349, %v214
  %v352 = vmax.f32 %v350, %v218
  %v353 = vmax.f32 %v351, %v224
  %v354 = vmax.f32 %v352, %v228
  %v355 = vmax.f32 %v353, %v234
  %v356 = vmax.f32 %v354, %v238
  %v357 = vmax.f32 %v355, %v244
  %v358 = vmax.f32 %v356, %v248
  %v359 = vmax.f32 %v357, %v254
  %v360 = vmax.f32 %v358, %v258
  %v361 = vmax.f32 %v359, %v360
  %v362 = vrot.slane %v361, 4
  %v363 = vmax.f32 %v361, %v362
  %v364 = vrot.slane %v363, 2
  %v365 = vmax.f32 %v363, %v364
  %v366 = vrot.slane %v365, 1
  %v367 = vmax.f32 %v365, %v366
  %v368 = vmax.f32 %v186, %v196
  %v369 = vmax.f32 %v190, %v200
  %v370 = vmax.f32 %v368, %v206
  %v371 = vmax.f32 %v369, %v210
  %v372 = vmax.f32 %v370, %v216
  %v373 = vmax.f32 %v371, %v220
  %v374 = vmax.f32 %v372, %v226
  %v375 = vmax.f32 %v373, %v230
  %v376 = vmax.f32 %v374, %v236
  %v377 = vmax.f32 %v375, %v240
  %v378 = vmax.f32 %v376, %v246
  %v379 = vmax.f32 %v377, %v250
  %v380 = vmax.f32 %v378, %v256
  %v381 = vmax.f32 %v379, %v260
  %v382 = vmax.f32 %v380, %v381
  %v383 = vrot.slane %v382, 4
  %v384 = vmax.f32 %v382, %v383
  %v385 = vrot.slane %v384, 2
  %v386 = vmax.f32 %v384, %v385
  %v387 = vrot.slane %v386, 1
  %v388 = vmax.f32 %v386, %v387
  %v389 = vsel %vm91, 1, 0
  %v390 = vsel %vm92, 1, 0
  %vm391 = vcmp.eq.s32.totalorder %v389, 1
  %vm392 = vcmp.eq.s32.totalorder %v390, 1
  %v393 = vsel %vm391, %v367, 0.0
  %v394 = vsel %vm391, %v388, 0.0
  %v395 = vsel %vm392, %v367, 0.0
  %v396 = vsel %vm392, %v388, 0.0
  %397 = vmatprep.subr.bf16.mxu0 %v346
  %398 = vmatpush1.bf16.msra.mxu0 %v345
  %399 = vmatprep.subr.bf16.mxu0 %v344
  %400 = vmatpush1.bf16.msra.mxu0 %v343
  %401 = vmatprep.subr.bf16.mxu0 %v342
  %402 = vmatpush1.bf16.msra.mxu0 %v341
  %403 = vmatprep.subr.bf16.mxu0 %v340
  %404 = vmatpush1.bf16.msra.mxu0 %v339
  %405 = vmatprep.subr.bf16.mxu0 %v338
  %406 = vmatpush1.bf16.msra.mxu0 %v337
  %407 = vmatprep.subr.bf16.mxu0 %v336
  %408 = vmatpush1.bf16.msra.mxu0 %v335
  %409 = vmatprep.subr.bf16.mxu0 %v334
  %410 = vmatpush1.bf16.msra.mxu0 %v333
  %411 = vmatprep.subr.bf16.mxu0 %v332
  %412 = vmatpush1.bf16.msra.mxu0 %v331
  %413 = vmatprep.subr.bf16.mxu0 0
  %414 = vmatpush2.bf16.msra.mxu0 0
  %415 = vmatprep.subr.bf16.mxu0 0
  %416 = vmatpush2.bf16.msra.mxu0 0
  %417 = vmatprep.subr.bf16.mxu0 0
  %418 = vmatpush2.bf16.msra.mxu0 0
  %419 = vmatprep.subr.bf16.mxu0 0
  %420 = vmatpush2.bf16.msra.mxu0 0
  %421 = vmatprep.subr.bf16.mxu0 0
  %422 = vmatpush2.bf16.msra.mxu0 0
  %423 = vmatprep.subr.bf16.mxu0 0
  %424 = vmatpush2.bf16.msra.mxu0 0
  %425 = vmatprep.subr.bf16.mxu0 0
  %426 = vmatpush2.bf16.msra.mxu0 0
  %427 = vmatprep.subr.bf16.mxu0 0
  %428 = vmatpush2.bf16.msra.mxu0 0
  %429 = vmatprep.mubr.bf16.mxu0 0
  %430 = vmatmul.mubr.bf16.gmra.mxu0 %v330
  %v431 = vpop.f32.mrf.mxu0
  %v432 = vadd.f32 %v393, %v431
  %v433 = vpop.f32.mrf.mxu0
  %v434 = vadd.f32 %v394, %v433
  %v435 = vpop.f32.mrf.mxu0
  %v436 = vadd.f32 %v395, %v435
  %v437 = vpop.f32.mrf.mxu0
  %v438 = vadd.f32 %v396, %v437
  %439 = vdwg.mxu0
  %440 = vmax.xlane.f32.xlu0 %v326
  %v441 = vpop.xlane.xlu0 %440
  %v442 = vsel %vm310, %v328, -inf
  %443 = vmax.xlane.f32.xlu0 %v442
  %v444 = vpop.xlane.xlu0 %443
  %v445 = vsel %vm310, %v444, 0.0
  %v446 = vadd.f32 %v441, %v445
  %v447 = vrot.slane %v446, 4
  %v448 = vadd.f32 %v446, %v447
  %v449 = vrot.slane %v448, 2
  %v450 = vadd.f32 %v448, %v449
  %v451 = vrot.slane %v450, 1
  %v452 = vadd.f32 %v450, %v451
  %v453 = vmax.f32 %v452, 1e-12
  %v454 = vrcp.pop %v453
  %v455 = vmul.f32 %v441, %v454
  %v456 = vmul.f32 %v444, %v454
  %v457 = vrsqrt.pop %v455
  %v458 = vmul.f32 %v455, %v457
  %vm459 = vcmp.eq.f32.partialorder %v455, inf
  %v460 = vsel %vm459, %v455, %v458
  %vm461 = vcmp.eq.f32.partialorder %v455, 0.0
  %v462 = vand.u32 %v455, 2147483648
  %v463 = vsel %vm461, %v462, %v460
  %v464 = vrsqrt.pop %v456
  %v465 = vmul.f32 %v456, %v464
  %vm466 = vcmp.eq.f32.partialorder %v456, inf
  %v467 = vsel %vm466, %v456, %v465
  %vm468 = vcmp.eq.f32.partialorder %v456, 0.0
  %v469 = vand.u32 %v456, 2147483648
  %v470 = vsel %vm468, %v469, %v467
  %v471 = vsel %vm310, %v470, 1.0
  %s472 = scalar_lea.vmem %s0, 128
  %v473 = vld [vmem:[%s472] sm:$0xff]
  %v474 = vld [vmem:[%s472 + $0x8] sm:$0xff]
  %v475 = vld [vmem:[%s472 + $0x10] sm:$0xff]
  %v476 = vld [vmem:[%s472 + $0x18] sm:$0xff]
  %v477 = vld [vmem:[%s472 + $0x20] sm:$0xff]
  %v478 = vld [vmem:[%s472 + $0x28] sm:$0xff]
  %v479 = vld [vmem:[%s472 + $0x30] sm:$0xff]
  %v480 = vld [vmem:[%s472 + $0x38] sm:$0xff]
  %v481 = vld [vmem:[%s472 + $0x40] sm:$0xff]
  %v482 = vld [vmem:[%s472 + $0x48] sm:$0xff]
  %v483 = vld [vmem:[%s472 + $0x50] sm:$0xff]
  %v484 = vld [vmem:[%s472 + $0x58] sm:$0xff]
  %v485 = vld [vmem:[%s472 + $0x60] sm:$0xff]
  %v486 = vld [vmem:[%s472 + $0x68] sm:$0xff]
  %v487 = vld [vmem:[%s472 + $0x70] sm:$0xff]
  %v488 = vld [vmem:[%s472 + $0x78] sm:$0xff]
  %v489 = vpack.c.bf16 %v474, %v473
  %v490 = vpack.c.bf16 %v476, %v475
  %v491 = vpack.c.bf16 %v478, %v477
  %v492 = vpack.c.bf16 %v480, %v479
  %v493 = vpack.c.bf16 %v482, %v481
  %v494 = vpack.c.bf16 %v484, %v483
  %v495 = vpack.c.bf16 %v486, %v485
  %v496 = vpack.c.bf16 %v488, %v487
  %v498 = vsel %vm117, %v489, 0
  %v501 = vsel %vm117, %v490, 0
  %v504 = vsel %vm117, %v491, 0
  %v507 = vsel %vm117, %v492, 0
  %v510 = vsel %vm117, %v493, 0
  %v513 = vsel %vm117, %v494, 0
  %v516 = vsel %vm117, %v495, 0
  %v519 = vsel %vm117, %v496, 0
  %521 = vmatprep.subr.bf16.mxu0 0
  %522 = vmatpush1.bf16.msra.mxu0 0
  %523 = vmatprep.subr.bf16.mxu0 0
  %524 = vmatpush1.bf16.msra.mxu0 0
  %525 = vmatprep.subr.bf16.mxu0 0
  %526 = vmatpush1.bf16.msra.mxu0 0
  %527 = vmatprep.subr.bf16.mxu0 0
  %528 = vmatpush1.bf16.msra.mxu0 0
  %529 = vmatprep.subr.bf16.mxu0 0
  %530 = vmatpush1.bf16.msra.mxu0 0
  %531 = vmatprep.subr.bf16.mxu0 0
  %532 = vmatpush1.bf16.msra.mxu0 0
  %533 = vmatprep.subr.bf16.mxu0 0
  %534 = vmatpush1.bf16.msra.mxu0 0
  %535 = vmatprep.subr.bf16.mxu0 %v147
  %536 = vmatpush1.bf16.msra.mxu0 %v144
  %537 = vmatprep.subr.bf16.mxu0 0
  %538 = vmatpush2.bf16.msra.mxu0 0
  %539 = vmatprep.subr.bf16.mxu0 0
  %540 = vmatpush2.bf16.msra.mxu0 0
  %541 = vmatprep.subr.bf16.mxu0 0
  %542 = vmatpush2.bf16.msra.mxu0 0
  %543 = vmatprep.subr.bf16.mxu0 0
  %544 = vmatpush2.bf16.msra.mxu0 0
  %545 = vmatprep.subr.bf16.mxu0 0
  %546 = vmatpush2.bf16.msra.mxu0 0
  %547 = vmatprep.subr.bf16.mxu0 0
  %548 = vmatpush2.bf16.msra.mxu0 0
  %549 = vmatprep.subr.bf16.mxu0 0
  %550 = vmatpush2.bf16.msra.mxu0 0
  %551 = vmatprep.subr.bf16.mxu0 0
  %552 = vmatpush2.bf16.msra.mxu0 0
  %553 = vmatprep.mubr.bf16.mxu0 0
  %554 = vmatmul.mubr.bf16.gmra.mxu0 %v498
  %v555 = vpop.f32.mrf.mxu0
  %v556 = vadd.f32 0.0, %v555
  %v557 = vpop.f32.mrf.mxu0
  %v558 = vadd.f32 0.0, %v557
  %v559 = vpop.f32.mrf.mxu0
  %v560 = vadd.f32 0.0, %v559
  %v561 = vpop.f32.mrf.mxu0
  %v562 = vadd.f32 0.0, %v561
  %563 = vmatprep.mubr.bf16.mxu0 0
  %564 = vmatmul.mubr.bf16.gmra.mxu0 %v501
  %v565 = vpop.f32.mrf.mxu0
  %v566 = vadd.f32 0.0, %v565
  %v567 = vpop.f32.mrf.mxu0
  %v568 = vadd.f32 0.0, %v567
  %v569 = vpop.f32.mrf.mxu0
  %v570 = vadd.f32 0.0, %v569
  %v571 = vpop.f32.mrf.mxu0
  %v572 = vadd.f32 0.0, %v571
  %573 = vmatprep.mubr.bf16.mxu0 0
  %574 = vmatmul.mubr.bf16.gmra.mxu0 %v504
  %v575 = vpop.f32.mrf.mxu0
  %v576 = vadd.f32 0.0, %v575
  %v577 = vpop.f32.mrf.mxu0
  %v578 = vadd.f32 0.0, %v577
  %v579 = vpop.f32.mrf.mxu0
  %v580 = vadd.f32 0.0, %v579
  %v581 = vpop.f32.mrf.mxu0
  %v582 = vadd.f32 0.0, %v581
  %583 = vmatprep.mubr.bf16.mxu0 0
  %584 = vmatmul.mubr.bf16.gmra.mxu0 %v507
  %v585 = vpop.f32.mrf.mxu0
  %v586 = vadd.f32 0.0, %v585
  %v587 = vpop.f32.mrf.mxu0
  %v588 = vadd.f32 0.0, %v587
  %v589 = vpop.f32.mrf.mxu0
  %v590 = vadd.f32 0.0, %v589
  %v591 = vpop.f32.mrf.mxu0
  %v592 = vadd.f32 0.0, %v591
  %593 = vmatprep.mubr.bf16.mxu0 0
  %594 = vmatmul.mubr.bf16.gmra.mxu0 %v510
  %v595 = vpop.f32.mrf.mxu0
  %v596 = vadd.f32 0.0, %v595
  %v597 = vpop.f32.mrf.mxu0
  %v598 = vadd.f32 0.0, %v597
  %v599 = vpop.f32.mrf.mxu0
  %v600 = vadd.f32 0.0, %v599
  %v601 = vpop.f32.mrf.mxu0
  %v602 = vadd.f32 0.0, %v601
  %603 = vmatprep.mubr.bf16.mxu0 0
  %604 = vmatmul.mubr.bf16.gmra.mxu0 %v513
  %v605 = vpop.f32.mrf.mxu0
  %v606 = vadd.f32 0.0, %v605
  %v607 = vpop.f32.mrf.mxu0
  %v608 = vadd.f32 0.0, %v607
  %v609 = vpop.f32.mrf.mxu0
  %v610 = vadd.f32 0.0, %v609
  %v611 = vpop.f32.mrf.mxu0
  %v612 = vadd.f32 0.0, %v611
  %613 = vmatprep.mubr.bf16.mxu0 0
  %614 = vmatmul.mubr.bf16.gmra.mxu0 %v516
  %v615 = vpop.f32.mrf.mxu0
  %v616 = vadd.f32 0.0, %v615
  %v617 = vpop.f32.mrf.mxu0
  %v618 = vadd.f32 0.0, %v617
  %v619 = vpop.f32.mrf.mxu0
  %v620 = vadd.f32 0.0, %v619
  %v621 = vpop.f32.mrf.mxu0
  %v622 = vadd.f32 0.0, %v621
  %623 = vmatprep.mubr.bf16.mxu0 0
  %624 = vmatmul.mubr.bf16.gmra.mxu0 %v519
  %v625 = vpop.f32.mrf.mxu0
  %v626 = vadd.f32 0.0, %v625
  %v627 = vpop.f32.mrf.mxu0
  %v628 = vadd.f32 0.0, %v627
  %v629 = vpop.f32.mrf.mxu0
  %v630 = vadd.f32 0.0, %v629
  %v631 = vpop.f32.mrf.mxu0
  %v632 = vadd.f32 0.0, %v631
  %633 = vdwg.mxu0
  %634 = vmatprep.subr.bf16.mxu0 0
  %635 = vmatpush1.bf16.xpose.msra.mxu0 %v519
  %636 = vmatprep.subr.bf16.mxu0 0
  %637 = vmatpush1.bf16.xpose.msra.mxu0 %v516
  %638 = vmatprep.subr.bf16.mxu0 0
  %639 = vmatpush1.bf16.xpose.msra.mxu0 %v513
  %640 = vmatprep.subr.bf16.mxu0 0
  %641 = vmatpush1.bf16.xpose.msra.mxu0 %v510
  %642 = vmatprep.subr.bf16.mxu0 0
  %643 = vmatpush1.bf16.xpose.msra.mxu0 %v507
  %644 = vmatprep.subr.bf16.mxu0 0
  %645 = vmatpush1.bf16.xpose.msra.mxu0 %v504
  %646 = vmatprep.subr.bf16.mxu0 0
  %647 = vmatpush1.bf16.xpose.msra.mxu0 %v501
  %648 = vmatprep.subr.bf16.mxu0 0
  %649 = vmatpush1.bf16.xpose.msra.mxu0 %v498
  %650 = vmatprep.subr.bf16.mxu0 0
  %651 = vmatpush2.bf16.xpose.msra.mxu0 0
  %652 = vmatprep.subr.bf16.mxu0 0
  %653 = vmatpush2.bf16.xpose.msra.mxu0 0
  %654 = vmatprep.subr.bf16.mxu0 0
  %655 = vmatpush2.bf16.xpose.msra.mxu0 0
  %656 = vmatprep.subr.bf16.mxu0 0
  %657 = vmatpush2.bf16.xpose.msra.mxu0 0
  %658 = vmatprep.subr.bf16.mxu0 0
  %659 = vmatpush2.bf16.xpose.msra.mxu0 0
  %660 = vmatprep.subr.bf16.mxu0 0
  %661 = vmatpush2.bf16.xpose.msra.mxu0 0
  %662 = vmatprep.subr.bf16.mxu0 0
  %663 = vmatpush2.bf16.xpose.msra.mxu0 0
  %664 = vmatprep.subr.bf16.mxu0 0
  %665 = vmatpush2.bf16.xpose.msra.mxu0 0
  %666 = vmatprep.mubr.bf16.mxu0 0
  %667 = vmatmul.mubr.bf16.gmra.mxu0 %v263
  %v668 = vpop.f32.mrf.mxu0
  %v669 = vadd.f32 0.0, %v668
  %v670 = vpop.f32.mrf.mxu0
  %v671 = vpop.f32.mrf.mxu0
  %v672 = vadd.f32 0.0, %v671
  %v673 = vpop.f32.mrf.mxu0
  %674 = vdwg.mxu0
  %v675 = vmul.f32 %v669, 10.0
  %v676 = vmul.f32 %v672, 10.0
  %677 = vmax.xlane.f32.xlu0 %v675
  %v678 = vpop.xlane.xlu0 %677
  %v679 = vsel %vm310, %v676, -inf
  %680 = vmax.xlane.f32.xlu0 %v679
  %v681 = vpop.xlane.xlu0 %680
  %v682 = vsub.f32 %v675, %v678
  %v683 = vsub.f32 %v676, %v681
  %v684 = vmul.f32 %v682, 1.442695
  %v685 = vpow.pop %v684
  %v686 = vmul.f32 %v683, 1.442695
  %v687 = vpow.pop %v686
  %688 = vadd.xlane.f32.xlu0 %v685
  %v689 = vpop.xlane.xlu0 %688
  %v690 = vsel %vm310, %v687, 0.0
  %691 = vadd.xlane.f32.xlu0 %v690
  %v692 = vpop.xlane.xlu0 %691
  %v693 = vrcp.pop %v689
  %v694 = vmul.f32 %v685, %v693
  %v695 = vrcp.pop %v692
  %v696 = vmul.f32 %v687, %v695
  %v697 = vsel %vm310, %v696, 0.0078125
  %v698 = vpack.c.bf16 %v697, %v694
  %v699 = vpack.c.bf16 %v560, %v556
  %v700 = vpack.c.bf16 %v562, %v558
  %v701 = vpack.c.bf16 %v570, %v566
  %v702 = vpack.c.bf16 %v572, %v568
  %v703 = vpack.c.bf16 %v580, %v576
  %v704 = vpack.c.bf16 %v582, %v578
  %v705 = vpack.c.bf16 %v590, %v586
  %v706 = vpack.c.bf16 %v592, %v588
  %v707 = vpack.c.bf16 %v600, %v596
  %v708 = vpack.c.bf16 %v602, %v598
  %v709 = vpack.c.bf16 %v610, %v606
  %v710 = vpack.c.bf16 %v612, %v608
  %v711 = vpack.c.bf16 %v620, %v616
  %v712 = vpack.c.bf16 %v622, %v618
  %v713 = vpack.c.bf16 %v630, %v626
  %v714 = vpack.c.bf16 %v632, %v628
  %v715 = vmax.f32 %v556, %v566
  %v716 = vmax.f32 %v560, %v570
  %v717 = vmax.f32 %v715, %v576
  %v718 = vmax.f32 %v716, %v580
  %v719 = vmax.f32 %v717, %v586
  %v720 = vmax.f32 %v718, %v590
  %v721 = vmax.f32 %v719, %v596
  %v722 = vmax.f32 %v720, %v600
  %v723 = vmax.f32 %v721, %v606
  %v724 = vmax.f32 %v722, %v610
  %v725 = vmax.f32 %v723, %v616
  %v726 = vmax.f32 %v724, %v620
  %v727 = vmax.f32 %v725, %v626
  %v728 = vmax.f32 %v726, %v630
  %v729 = vmax.f32 %v727, %v728
  %v730 = vrot.slane %v729, 4
  %v731 = vmax.f32 %v729, %v730
  %v732 = vrot.slane %v731, 2
  %v733 = vmax.f32 %v731, %v732
  %v734 = vrot.slane %v733, 1
  %v735 = vmax.f32 %v733, %v734
  %v736 = vmax.f32 %v558, %v568
  %v737 = vmax.f32 %v562, %v572
  %v738 = vmax.f32 %v736, %v578
  %v739 = vmax.f32 %v737, %v582
  %v740 = vmax.f32 %v738, %v588
  %v741 = vmax.f32 %v739, %v592
  %v742 = vmax.f32 %v740, %v598
  %v743 = vmax.f32 %v741, %v602
  %v744 = vmax.f32 %v742, %v608
  %v745 = vmax.f32 %v743, %v612
  %v746 = vmax.f32 %v744, %v618
  %v747 = vmax.f32 %v745, %v622
  %v748 = vmax.f32 %v746, %v628
  %v749 = vmax.f32 %v747, %v632
  %v750 = vmax.f32 %v748, %v749
  %v751 = vrot.slane %v750, 4
  %v752 = vmax.f32 %v750, %v751
  %v753 = vrot.slane %v752, 2
  %v754 = vmax.f32 %v752, %v753
  %v755 = vrot.slane %v754, 1
  %v756 = vmax.f32 %v754, %v755
  %v757 = vsel %vm391, %v735, 0.0
  %v758 = vsel %vm391, %v756, 0.0
  %v759 = vsel %vm392, %v735, 0.0
  %v760 = vsel %vm392, %v756, 0.0
  %761 = vmatprep.subr.bf16.mxu0 %v714
  %762 = vmatpush1.bf16.msra.mxu0 %v713
  %763 = vmatprep.subr.bf16.mxu0 %v712
  %764 = vmatpush1.bf16.msra.mxu0 %v711
  %765 = vmatprep.subr.bf16.mxu0 %v710
  %766 = vmatpush1.bf16.msra.mxu0 %v709
  %767 = vmatprep.subr.bf16.mxu0 %v708
  %768 = vmatpush1.bf16.msra.mxu0 %v707
  %769 = vmatprep.subr.bf16.mxu0 %v706
  %770 = vmatpush1.bf16.msra.mxu0 %v705
  %771 = vmatprep.subr.bf16.mxu0 %v704
  %772 = vmatpush1.bf16.msra.mxu0 %v703
  %773 = vmatprep.subr.bf16.mxu0 %v702
  %774 = vmatpush1.bf16.msra.mxu0 %v701
  %775 = vmatprep.subr.bf16.mxu0 %v700
  %776 = vmatpush1.bf16.msra.mxu0 %v699
  %777 = vmatprep.subr.bf16.mxu0 0
  %778 = vmatpush2.bf16.msra.mxu0 0
  %779 = vmatprep.subr.bf16.mxu0 0
  %780 = vmatpush2.bf16.msra.mxu0 0
  %781 = vmatprep.subr.bf16.mxu0 0
  %782 = vmatpush2.bf16.msra.mxu0 0
  %783 = vmatprep.subr.bf16.mxu0 0
  %784 = vmatpush2.bf16.msra.mxu0 0
  %785 = vmatprep.subr.bf16.mxu0 0
  %786 = vmatpush2.bf16.msra.mxu0 0
  %787 = vmatprep.subr.bf16.mxu0 0
  %788 = vmatpush2.bf16.msra.mxu0 0
  %789 = vmatprep.subr.bf16.mxu0 0
  %790 = vmatpush2.bf16.msra.mxu0 0
  %791 = vmatprep.subr.bf16.mxu0 0
  %792 = vmatpush2.bf16.msra.mxu0 0
  %793 = vmatprep.mubr.bf16.mxu0 0
  %794 = vmatmul.mubr.bf16.gmra.mxu0 %v698
  %v795 = vpop.f32.mrf.mxu0
  %v796 = vadd.f32 %v757, %v795
  %v797 = vpop.f32.mrf.mxu0
  %v798 = vadd.f32 %v758, %v797
  %v799 = vpop.f32.mrf.mxu0
  %v800 = vadd.f32 %v759, %v799
  %v801 = vpop.f32.mrf.mxu0
  %v802 = vadd.f32 %v760, %v801
  %803 = vdwg.mxu0
  %804 = vmax.xlane.f32.xlu0 %v694
  %v805 = vpop.xlane.xlu0 %804
  %v806 = vsel %vm310, %v696, -inf
  %807 = vmax.xlane.f32.xlu0 %v806
  %v808 = vpop.xlane.xlu0 %807
  %v809 = vsel %vm310, %v808, 0.0
  %v810 = vadd.f32 %v805, %v809
  %v811 = vrot.slane %v810, 4
  %v812 = vadd.f32 %v810, %v811
  %v813 = vrot.slane %v812, 2
  %v814 = vadd.f32 %v812, %v813
  %v815 = vrot.slane %v814, 1
  %v816 = vadd.f32 %v814, %v815
  %v817 = vmax.f32 %v816, 1e-12
  %v818 = vrcp.pop %v817
  %v819 = vmul.f32 %v805, %v818
  %v820 = vmul.f32 %v808, %v818
  %v821 = vrsqrt.pop %v819
  %v822 = vmul.f32 %v819, %v821
  %vm823 = vcmp.eq.f32.partialorder %v819, inf
  %v824 = vsel %vm823, %v819, %v822
  %vm825 = vcmp.eq.f32.partialorder %v819, 0.0
  %v826 = vand.u32 %v819, 2147483648
  %v827 = vsel %vm825, %v826, %v824
  %v828 = vrsqrt.pop %v820
  %v829 = vmul.f32 %v820, %v828
  %vm830 = vcmp.eq.f32.partialorder %v820, inf
  %v831 = vsel %vm830, %v820, %v829
  %vm832 = vcmp.eq.f32.partialorder %v820, 0.0
  %v833 = vand.u32 %v820, 2147483648
  %v834 = vsel %vm832, %v833, %v831
  %v835 = vsel %vm310, %v834, 1.0
  %vm840 = vcmask 1045504
  %v841 = vrot.slane %v796, 2
  %v842 = vrot.slane %v798, 2
  %v843 = vrot.slane %v800, 2
  %v844 = vsel %vm840, %v841, %v843
  %v845 = vrot.slane %v802, 2
  %v846 = vsel %vm840, %v842, %v845
  %v853 = vsel %vm840, %v436, %v841
  %v854 = vsel %vm840, %v438, %v842
  %v855 = vpack.c.bf16 %v853, %v432
  %v856 = vpack.c.bf16 %v854, %v434
  %v857 = vpack.c.bf16 %v843, %v844
  %v858 = vpack.c.bf16 %v845, %v846
  %v891 = vunpack.c.l.b16 %v33
  %v892 = vunpack.c.h.b16 %v33
  %v893 = vunpack.c.l.b16 %v34
  %v894 = vunpack.c.h.b16 %v34
  %v895 = vunpack.c.l.b16 %v35
  %v896 = vunpack.c.h.b16 %v35
  %v897 = vunpack.c.l.b16 %v36
  %v898 = vunpack.c.h.b16 %v36
  %v899 = vunpack.c.l.b16 %v37
  %v900 = vunpack.c.h.b16 %v37
  %v901 = vunpack.c.l.b16 %v38
  %v902 = vunpack.c.h.b16 %v38
  %v903 = vunpack.c.l.b16 %v39
  %v904 = vunpack.c.h.b16 %v39
  %v905 = vunpack.c.l.b16 %v40
  %v906 = vunpack.c.h.b16 %v40
  %v907 = vunpack.c.l.b16 %v41
  %v908 = vunpack.c.h.b16 %v41
  %v909 = vunpack.c.l.b16 %v42
  %v910 = vunpack.c.h.b16 %v42
  %v911 = vunpack.c.l.b16 %v43
  %v912 = vunpack.c.h.b16 %v43
  %v913 = vunpack.c.l.b16 %v44
  %v914 = vunpack.c.h.b16 %v44
  %v915 = vunpack.c.l.b16 %v45
  %v916 = vunpack.c.h.b16 %v45
  %v917 = vunpack.c.l.b16 %v46
  %v918 = vunpack.c.h.b16 %v46
  %v919 = vunpack.c.l.b16 %v47
  %v920 = vunpack.c.h.b16 %v47
  %v921 = vunpack.c.l.b16 %v48
  %v922 = vunpack.c.h.b16 %v48
  %v923 = vunpack.c.l.b16 %v49
  %v924 = vunpack.c.h.b16 %v49
  %v925 = vunpack.c.l.b16 %v50
  %v926 = vunpack.c.h.b16 %v50
  %v927 = vunpack.c.l.b16 %v51
  %v928 = vunpack.c.h.b16 %v51
  %v929 = vunpack.c.l.b16 %v52
  %v930 = vunpack.c.h.b16 %v52
  %v931 = vunpack.c.l.b16 %v53
  %v932 = vunpack.c.h.b16 %v53
  %v933 = vunpack.c.l.b16 %v54
  %v934 = vunpack.c.h.b16 %v54
  %v935 = vunpack.c.l.b16 %v55
  %v936 = vunpack.c.h.b16 %v55
  %v937 = vunpack.c.l.b16 %v56
  %v938 = vunpack.c.h.b16 %v56
  %v939 = vunpack.c.l.b16 %v57
  %v940 = vunpack.c.h.b16 %v57
  %v941 = vunpack.c.l.b16 %v58
  %v942 = vunpack.c.h.b16 %v58
  %v943 = vunpack.c.l.b16 %v59
  %v944 = vunpack.c.h.b16 %v59
  %v945 = vunpack.c.l.b16 %v60
  %v946 = vunpack.c.h.b16 %v60
  %v947 = vunpack.c.l.b16 %v61
  %v948 = vunpack.c.h.b16 %v61
  %v949 = vunpack.c.l.b16 %v62
  %v950 = vunpack.c.h.b16 %v62
  %v951 = vunpack.c.l.b16 %v63
  %v952 = vunpack.c.h.b16 %v63
  %v953 = vunpack.c.l.b16 %v64
  %v954 = vunpack.c.h.b16 %v64
  %v955 = vpack.c.b16 %v893, %v891
  %v956 = vpack.c.b16 %v894, %v892
  %v957 = vpack.c.b16 %v897, %v895
  %v958 = vpack.c.b16 %v898, %v896
  %v959 = vpack.c.b16 %v901, %v899
  %v960 = vpack.c.b16 %v902, %v900
  %v961 = vpack.c.b16 %v905, %v903
  %v962 = vpack.c.b16 %v906, %v904
  %v963 = vpack.c.b16 %v909, %v907
  %v964 = vpack.c.b16 %v910, %v908
  %v965 = vpack.c.b16 %v913, %v911
  %v966 = vpack.c.b16 %v914, %v912
  %v967 = vpack.c.b16 %v917, %v915
  %v968 = vpack.c.b16 %v918, %v916
  %v969 = vpack.c.b16 %v921, %v919
  %v970 = vpack.c.b16 %v922, %v920
  %v971 = vpack.c.b16 %v925, %v923
  %v972 = vpack.c.b16 %v926, %v924
  %v973 = vpack.c.b16 %v929, %v927
  %v974 = vpack.c.b16 %v930, %v928
  %v975 = vpack.c.b16 %v933, %v931
  %v976 = vpack.c.b16 %v934, %v932
  %v977 = vpack.c.b16 %v937, %v935
  %v978 = vpack.c.b16 %v938, %v936
  %v979 = vpack.c.b16 %v941, %v939
  %v980 = vpack.c.b16 %v942, %v940
  %v981 = vpack.c.b16 %v945, %v943
  %v982 = vpack.c.b16 %v946, %v944
  %v983 = vpack.c.b16 %v949, %v947
  %v984 = vpack.c.b16 %v950, %v948
  %v985 = vpack.c.b16 %v953, %v951
  %v986 = vpack.c.b16 %v954, %v952
  %1019 = vmatprep.subr.bf16.mxu0 %v970
  %1020 = vmatpush1.bf16.msra.mxu0 %v969
  %1021 = vmatprep.subr.bf16.mxu0 %v968
  %1022 = vmatpush1.bf16.msra.mxu0 %v967
  %1023 = vmatprep.subr.bf16.mxu0 %v966
  %1024 = vmatpush1.bf16.msra.mxu0 %v965
  %1025 = vmatprep.subr.bf16.mxu0 %v964
  %1026 = vmatpush1.bf16.msra.mxu0 %v963
  %1027 = vmatprep.subr.bf16.mxu0 %v962
  %1028 = vmatpush1.bf16.msra.mxu0 %v961
  %1029 = vmatprep.subr.bf16.mxu0 %v960
  %1030 = vmatpush1.bf16.msra.mxu0 %v959
  %1031 = vmatprep.subr.bf16.mxu0 %v958
  %1032 = vmatpush1.bf16.msra.mxu0 %v957
  %1033 = vmatprep.subr.bf16.mxu0 %v956
  %1034 = vmatpush1.bf16.msra.mxu0 %v955
  %1035 = vmatprep.subr.bf16.mxu0 %v986
  %1036 = vmatpush2.bf16.msra.mxu0 %v985
  %1037 = vmatprep.subr.bf16.mxu0 %v984
  %1038 = vmatpush2.bf16.msra.mxu0 %v983
  %1039 = vmatprep.subr.bf16.mxu0 %v982
  %1040 = vmatpush2.bf16.msra.mxu0 %v981
  %1041 = vmatprep.subr.bf16.mxu0 %v980
  %1042 = vmatpush2.bf16.msra.mxu0 %v979
  %1043 = vmatprep.subr.bf16.mxu0 %v978
  %1044 = vmatpush2.bf16.msra.mxu0 %v977
  %1045 = vmatprep.subr.bf16.mxu0 %v976
  %1046 = vmatpush2.bf16.msra.mxu0 %v975
  %1047 = vmatprep.subr.bf16.mxu0 %v974
  %1048 = vmatpush2.bf16.msra.mxu0 %v973
  %1049 = vmatprep.subr.bf16.mxu0 %v972
  %1050 = vmatpush2.bf16.msra.mxu0 %v971
  %1051 = vmatprep.mubr.bf16.mxu0 %v856
  %1052 = vmatmul.mubr.bf16.gmra.mxu0 %v855
  %v1053 = vpop.f32.mrf.mxu0
  %v1054 = vadd.f32 0.0, %v1053
  %v1055 = vpop.f32.mrf.mxu0
  %v1056 = vadd.f32 0.0, %v1055
  %v1057 = vpop.f32.mrf.mxu0
  %v1058 = vadd.f32 0.0, %v1057
  %v1059 = vpop.f32.mrf.mxu0
  %v1060 = vadd.f32 0.0, %v1059
  %1061 = vmatprep.mubr.bf16.mxu0 %v858
  %1062 = vmatmul.mubr.bf16.gmra.mxu0 %v857
  %v1063 = vpop.f32.mrf.mxu0
  %v1064 = vadd.f32 0.0, %v1063
  %v1065 = vpop.f32.mrf.mxu0
  %v1066 = vadd.f32 0.0, %v1065
  %v1067 = vpop.f32.mrf.mxu0
  %v1068 = vadd.f32 0.0, %v1067
  %v1069 = vpop.f32.mrf.mxu0
  %v1070 = vadd.f32 0.0, %v1069
  %1071 = vdwg.mxu0
  %v1072 = vpack.c.bf16 %v1058, %v1054
  %v1073 = vpack.c.bf16 %v1060, %v1056
  %v1074 = vpack.c.bf16 %v1068, %v1064
  %v1075 = vpack.c.bf16 %v1070, %v1066
  %v1080 = vunpack.c.l.b16 %v65
  %v1081 = vunpack.c.l.b16 %v66
  %v1082 = vunpack.c.l.b16 %v67
  %v1083 = vunpack.c.l.b16 %v68
  %v1084 = vpack.c.b16 %v1081, %v1080
  %v1085 = vpack.c.b16 %v1083, %v1082
  %vm1086 = vcmask 228352
  %v1088 = vsel %vm1086, %v1084, 0
  %v1091 = vsel %vm1086, %v1085, 0
  %v1094 = vsel %vm840, %v1074, 0
  %v1097 = vsel %vm840, %v1075, 0
  %1099 = vmatprep.subr.bf16.mxu0 0
  %1100 = vmatpush1.bf16.msra.mxu0 0
  %1101 = vmatprep.subr.bf16.mxu0 0
  %1102 = vmatpush1.bf16.msra.mxu0 0
  %1103 = vmatprep.subr.bf16.mxu0 0
  %1104 = vmatpush1.bf16.msra.mxu0 0
  %1105 = vmatprep.subr.bf16.mxu0 0
  %1106 = vmatpush1.bf16.msra.mxu0 0
  %1107 = vmatprep.subr.bf16.mxu0 0
  %1108 = vmatpush1.bf16.msra.mxu0 0
  %1109 = vmatprep.subr.bf16.mxu0 0
  %1110 = vmatpush1.bf16.msra.mxu0 0
  %1111 = vmatprep.subr.bf16.mxu0 %v1097
  %1112 = vmatpush1.bf16.msra.mxu0 %v1094
  %1113 = vmatprep.subr.bf16.mxu0 %v1073
  %1114 = vmatpush1.bf16.msra.mxu0 %v1072
  %1115 = vmatprep.subr.bf16.mxu0 0
  %1116 = vmatpush2.bf16.msra.mxu0 0
  %1117 = vmatprep.subr.bf16.mxu0 0
  %1118 = vmatpush2.bf16.msra.mxu0 0
  %1119 = vmatprep.subr.bf16.mxu0 0
  %1120 = vmatpush2.bf16.msra.mxu0 0
  %1121 = vmatprep.subr.bf16.mxu0 0
  %1122 = vmatpush2.bf16.msra.mxu0 0
  %1123 = vmatprep.subr.bf16.mxu0 0
  %1124 = vmatpush2.bf16.msra.mxu0 0
  %1125 = vmatprep.subr.bf16.mxu0 0
  %1126 = vmatpush2.bf16.msra.mxu0 0
  %1127 = vmatprep.subr.bf16.mxu0 0
  %1128 = vmatpush2.bf16.msra.mxu0 0
  %1129 = vmatprep.subr.bf16.mxu0 0
  %1130 = vmatpush2.bf16.msra.mxu0 0
  %1131 = vmatprep.mubr.bf16.mxu0 0
  %1132 = vmatmul.mubr.bf16.gmra.mxu0 %v1088
  %v1133 = vpop.f32.mrf.mxu0
  %v1134 = vadd.f32 0.0, %v1133
  %v1135 = vpop.f32.mrf.mxu0
  %v1136 = vadd.f32 0.0, %v1135
  %v1137 = vpop.f32.mrf.mxu0
  %v1138 = vadd.f32 0.0, %v1137
  %v1139 = vpop.f32.mrf.mxu0
  %v1140 = vadd.f32 0.0, %v1139
  %1141 = vmatprep.mubr.bf16.mxu0 0
  %1142 = vmatmul.mubr.bf16.gmra.mxu0 %v1091
  %v1143 = vpop.f32.mrf.mxu0
  %v1144 = vadd.f32 0.0, %v1143
  %v1145 = vpop.f32.mrf.mxu0
  %v1146 = vadd.f32 0.0, %v1145
  %v1147 = vpop.f32.mrf.mxu0
  %v1148 = vadd.f32 0.0, %v1147
  %v1149 = vpop.f32.mrf.mxu0
  %v1150 = vadd.f32 0.0, %v1149
  %1151 = vdwg.mxu0
  %v1152 = vmax.f32 %v1134, 0.0
  %v1153 = vmax.f32 %v1136, 0.0
  %v1154 = vmax.f32 %v1138, 0.0
  %v1155 = vmax.f32 %v1140, 0.0
  %v1156 = vmax.f32 %v1144, 0.0
  %v1157 = vmax.f32 %v1146, 0.0
  %v1158 = vmax.f32 %v1148, 0.0
  %v1159 = vmax.f32 %v1150, 0.0
  %v1160 = vadd.f32 %v1152, %v432
  %v1161 = vadd.f32 %v1153, %v434
  %v1162 = vadd.f32 %v1154, %v853
  %v1163 = vadd.f32 %v1155, %v854
  %v1164 = vadd.f32 %v1156, %v844
  %v1165 = vadd.f32 %v1157, %v846
  %v1166 = vadd.f32 %v1158, %v843
  %v1167 = vadd.f32 %v1159, %v845
  %v1168 = vmul.f32 %v432, %v69
  %v1169 = vmul.f32 %v434, %v70
  %v1170 = vmul.f32 %v853, %v71
  %v1171 = vmul.f32 %v854, %v72
  %v1172 = vadd.f32 %v1168, %v74
  %v1173 = vadd.f32 %v1169, %v75
  %v1174 = vadd.f32 %v1170, %v76
  %v1175 = vadd.f32 %v1171, %v77
  %v1176 = vmul.f32 %v1160, %v79
  %v1177 = vmul.f32 %v1161, %v80
  %v1178 = vmul.f32 %v1162, %v81
  %v1179 = vmul.f32 %v1163, %v82
  %v1180 = vadd.f32 %v1176, %v84
  %v1181 = vadd.f32 %v1177, %v85
  %v1182 = vadd.f32 %v1178, %v86
  %v1183 = vadd.f32 %v1179, %v87
  %1185 = vset.pattern.permute.xlu0 0
  %1186 = vperm.xlu0 %1185, %v463
  %v1187 = vpop.permute.xlu0 %1186
  %1190 = vset.pattern.permute.xlu0 0
  %1191 = vperm.xlu0 %1190, %v471
  %v1192 = vpop.permute.xlu0 %1191
  %v1194 = vmul.f32 %v1187, %v1172
  %v1195 = vmul.f32 %v1187, %v1173
  %v1196 = vmul.f32 %v1192, %v1174
  %v1197 = vmul.f32 %v1192, %v1175
  %1198 = vst [vmem:[%s6] sm:$0xff] %v1194
  %1199 = vst [vmem:[%s6 + $0x8] sm:$0xff] %v1195
  %1200 = vst [vmem:[%s6 + $0x10] sm:$0x3f] %v1196
  %1201 = vst [vmem:[%s6 + $0x18] sm:$0x3f] %v1197
  %s1202 = scalar_lea.vmem %s6, 64
  %1203 = vst [vmem:[%s1202] sm:$0xff] %v1172
  %1204 = vst [vmem:[%s1202 + $0x8] sm:$0xff] %v1173
  %1205 = vst [vmem:[%s1202 + $0x10] sm:$0x3f] %v1174
  %1206 = vst [vmem:[%s1202 + $0x18] sm:$0x3f] %v1175
  %v1207 = vmul.f32 %v1187, %v1180
  %v1208 = vmul.f32 %v1187, %v1181
  %v1209 = vmul.f32 %v1192, %v1182
  %v1210 = vmul.f32 %v1192, %v1183
  %s1211 = scalar_lea.vmem %s6, 128
  %1212 = vst [vmem:[%s1211] sm:$0xff] %v1207
  %1213 = vst [vmem:[%s1211 + $0x8] sm:$0xff] %v1208
  %1214 = vst [vmem:[%s1211 + $0x10] sm:$0x3f] %v1209
  %1215 = vst [vmem:[%s1211 + $0x18] sm:$0x3f] %v1210
  %s1216 = scalar_lea.vmem %s6, 192
  %1217 = vst [vmem:[%s1216] sm:$0xff] %v1180
  %1218 = vst [vmem:[%s1216 + $0x8] sm:$0xff] %v1181
  %1219 = vst [vmem:[%s1216 + $0x10] sm:$0x3f] %v1182
  %1220 = vst [vmem:[%s1216 + $0x18] sm:$0x3f] %v1183
  %v1225 = vrot.slane %v69, 2
  %v1226 = vrot.slane %v70, 2
  %v1227 = vrot.slane %v71, 2
  %v1228 = vsel %vm840, %v1225, %v1227
  %v1229 = vrot.slane %v72, 2
  %v1230 = vsel %vm840, %v1226, %v1229
  %v1237 = vmul.f32 %v853, %v1225
  %v1238 = vmul.f32 %v854, %v1226
  %v1239 = vmul.f32 %v844, %v1228
  %v1240 = vmul.f32 %v846, %v1230
  %v1241 = vmul.f32 %v843, %v1227
  %v1242 = vmul.f32 %v845, %v1229
  %v1247 = vrot.slane %v74, 2
  %v1248 = vrot.slane %v75, 2
  %v1249 = vrot.slane %v76, 2
  %v1250 = vsel %vm840, %v1247, %v1249
  %v1251 = vrot.slane %v77, 2
  %v1252 = vsel %vm840, %v1248, %v1251
  %v1259 = vadd.f32 %v1237, %v1247
  %v1260 = vadd.f32 %v1238, %v1248
  %v1261 = vadd.f32 %v1239, %v1250
  %v1262 = vadd.f32 %v1240, %v1252
  %v1263 = vadd.f32 %v1241, %v1249
  %v1264 = vadd.f32 %v1242, %v1251
  %v1269 = vrot.slane %v79, 2
  %v1270 = vrot.slane %v80, 2
  %v1271 = vrot.slane %v81, 2
  %v1272 = vsel %vm840, %v1269, %v1271
  %v1273 = vrot.slane %v82, 2
  %v1274 = vsel %vm840, %v1270, %v1273
  %v1281 = vmul.f32 %v1162, %v1269
  %v1282 = vmul.f32 %v1163, %v1270
  %v1283 = vmul.f32 %v1164, %v1272
  %v1284 = vmul.f32 %v1165, %v1274
  %v1285 = vmul.f32 %v1166, %v1271
  %v1286 = vmul.f32 %v1167, %v1273
  %v1291 = vrot.slane %v84, 2
  %v1292 = vrot.slane %v85, 2
  %v1293 = vrot.slane %v86, 2
  %v1294 = vsel %vm840, %v1291, %v1293
  %v1295 = vrot.slane %v87, 2
  %v1296 = vsel %vm840, %v1292, %v1295
  %v1303 = vadd.f32 %v1281, %v1291
  %v1304 = vadd.f32 %v1282, %v1292
  %v1305 = vadd.f32 %v1283, %v1294
  %v1306 = vadd.f32 %v1284, %v1296
  %v1307 = vadd.f32 %v1285, %v1293
  %v1308 = vadd.f32 %v1286, %v1295
  %1310 = vset.pattern.permute.xlu0 0
  %1311 = vperm.xlu0 %1310, %v827
  %v1312 = vpop.permute.xlu0 %1311
  %1315 = vset.pattern.permute.xlu0 0
  %1316 = vperm.xlu0 %1315, %v835
  %v1317 = vpop.permute.xlu0 %1316
  %v1325 = vrot.slane %v1259, 6
  %v1326 = vrot.slane %v1261, 6
  %v1327 = vsel %vm142, %v1325, %v1326
  %v1328 = vrot.slane %v1260, 6
  %v1329 = vrot.slane %v1262, 6
  %v1330 = vsel %vm142, %v1328, %v1329
  %v1331 = vrot.slane %v1263, 6
  %v1332 = vsel %vm142, %v1326, %v1331
  %v1333 = vrot.slane %v1264, 6
  %v1334 = vsel %vm142, %v1329, %v1333
  %v1339 = vmul.f32 %v1312, %v1327
  %v1340 = vmul.f32 %v1312, %v1330
  %v1341 = vmul.f32 %v1317, %v1332
  %v1342 = vmul.f32 %v1317, %v1334
  %s1343 = scalar_lea.vmem %s6, 32
  %1344 = vst [vmem:[%s1343] sm:$0xff] %v1339
  %1345 = vst [vmem:[%s1343 + $0x8] sm:$0xff] %v1340
  %1346 = vst [vmem:[%s1343 + $0x10] sm:$0x3f] %v1341
  %1347 = vst [vmem:[%s1343 + $0x18] sm:$0x3f] %v1342
  %s1348 = scalar_lea.vmem %s6, 96
  %1349 = vst [vmem:[%s1348] sm:$0xff] %v1327
  %1350 = vst [vmem:[%s1348 + $0x8] sm:$0xff] %v1330
  %1351 = vst [vmem:[%s1348 + $0x10] sm:$0x3f] %v1332
  %1352 = vst [vmem:[%s1348 + $0x18] sm:$0x3f] %v1334
  %v1359 = vrot.slane %v1303, 6
  %v1360 = vrot.slane %v1305, 6
  %v1361 = vsel %vm142, %v1359, %v1360
  %v1362 = vrot.slane %v1304, 6
  %v1363 = vrot.slane %v1306, 6
  %v1364 = vsel %vm142, %v1362, %v1363
  %v1365 = vrot.slane %v1307, 6
  %v1366 = vsel %vm142, %v1360, %v1365
  %v1367 = vrot.slane %v1308, 6
  %v1368 = vsel %vm142, %v1363, %v1367
  %v1373 = vmul.f32 %v1312, %v1361
  %v1374 = vmul.f32 %v1312, %v1364
  %v1375 = vmul.f32 %v1317, %v1366
  %v1376 = vmul.f32 %v1317, %v1368
  %s1377 = scalar_lea.vmem %s6, 160
  %1378 = vst [vmem:[%s1377] sm:$0xff] %v1373
  %1379 = vst [vmem:[%s1377 + $0x8] sm:$0xff] %v1374
  %1380 = vst [vmem:[%s1377 + $0x10] sm:$0x3f] %v1375
  %1381 = vst [vmem:[%s1377 + $0x18] sm:$0x3f] %v1376
  %s1382 = scalar_lea.vmem %s6, 224
  %1383 = vst [vmem:[%s1382] sm:$0xff] %v1361
  %1384 = vst [vmem:[%s1382 + $0x8] sm:$0xff] %v1364
  %1385 = vst [vmem:[%s1382 + $0x10] sm:$0x3f] %v1366
  %1386 = vst [vmem:[%s1382 + $0x18] sm:$0x3f] %v1368
  // Predicated region
  $region26: #{horeid_forward.1} parent=0 // pred_check
    _
  $region27: #{horeid_forward.1} parent=0 // pred_check_branch
    %1388 = sbr.rel (0) target = $region29
  $region28: #{horeid_forward.1} parent=0 // pred_region
    _
  $region29: #{horeid_forward.1} parent=0 // pred_fallthru
    _
  // Predicated region
  $region30: #{horeid_forward.1} parent=0 // pred_check
    _
  $region31: #{horeid_forward.1} parent=0 // pred_check_branch
    %1390 = sbr.rel (0) target = $region33
  $region32: #{horeid_forward.1} parent=0 // pred_region
    _
  $region33: #{horeid_forward.1} parent=0 // pred_fallthru
    _

</llo_original>
